<compile_context>
chip_gen: v7x
topology: tpu7x:2x2x1
jax: 0.10.0
libtpu: 0.0.40
codegen_flags: <defaults>
</compile_context>

<pallas_src>
import numpy as np
import jax
import jax.numpy as jnp
from jax.experimental import pallas as pl
from jax.experimental.pallas import tpu as pltpu

T = 8          # frames per video
F = 2048       # feature dim expected by fc1 (nn.Linear(2048, 2))
NUM_CLS = 2
N_COLS = 1 + 1 + NUM_CLS   # [att_logit, cls_logit, fc1_logit0, fc1_logit1]
W_PAD = 128                # lane-dense padded width of the fused weight


def pu_iic_kernel(x_ref, w_ref, out_ref):
    bb, t, f = x_ref.shape

    # One fused MXU pass over the features: (BB*T, F) @ (F, 128).
    feats = x_ref[...].reshape(bb * t, f)                 # layout no-op (T == 8)
    z = jnp.dot(feats, w_ref[...],
                preferred_element_type=jnp.float32)       # (BB*T, 128)
    z = z[:, :N_COLS].reshape(bb, t, N_COLS)              # (BB, T, 4) lane slice

    # ---- PInet stub: attention MIL over frames (softmax over T) ----
    att_logit = z[:, :, 0:1]                              # (BB, T, 1)
    att_logit = att_logit - jnp.max(att_logit, axis=1, keepdims=True)
    att_e = jnp.exp(att_logit)
    att = att_e / jnp.sum(att_e, axis=1, keepdims=True)   # (BB, T, 1)

    rx = jax.nn.sigmoid(z[:, :, 1:2])                     # (BB, T, 1)
    ax = jnp.sum(att * rx, axis=1, keepdims=True)         # (BB, 1, 1)

    # ---- PU_IIC_Net.fc1 on pooled feature, rx_m eliminated (bias in wrapper) ----
    logits = jnp.sum(att * z[:, :, 2:2 + NUM_CLS], axis=1, keepdims=True)  # (BB,1,2)

    # Single full-block store of the packed tile [rx | ax | logits].
    packed = jnp.concatenate(
        [rx,
         jnp.broadcast_to(ax, (bb, t, 1)),
         jnp.broadcast_to(logits, (bb, t, NUM_CLS))],
        axis=-1)                                          # (BB, T, 4)
    out_ref[...] = packed


def _round_up(n, m):
    return ((n + m - 1) // m) * m


def _choose_block(batch, videos_per_block, vmem_cap_bytes):
    """Pick videos-per-block (multiple of 8) and number of grid steps."""
    per_video_in = T * F * 4                       # 64 KiB of f32 features / video
    headroom = 16 << 20                            # weights + output tile + scratch
    bb_vmem_cap = max(8, ((vmem_cap_bytes - headroom) // (2 * per_video_in)) // 8 * 8)
    target = max(8, (min(videos_per_block, bb_vmem_cap) // 8) * 8)
    # Guarantee >= 2 grid steps when the batch allows (megacore sharding on v7x).
    if batch > 8:
        target = min(target, _round_up(pl.cdiv(batch, 2), 8))
    # Spread the batch evenly over blocks to minimize zero-padding waste.
    n_blocks = pl.cdiv(batch, target)
    bb = _round_up(pl.cdiv(batch, n_blocks), 8)
    return bb, n_blocks


def pu_iic_forward(x, w_att, w_cls, w_fc, b_fc, *, videos_per_block=256):
    B, t, f = x.shape
    assert t == T and f == F

    # Chip-aware VMEM budget (v5e/v6e: 128 MiB, v7x: 64 MiB per TensorCore).
    try:
        vmem_cap = int(pltpu.get_tpu_info().vmem_capacity_bytes)
    except Exception:
        vmem_cap = 64 << 20   # conservative fallback = v7x per-core VMEM

    bb, n_blocks = _choose_block(B, videos_per_block, vmem_cap)
    b_pad = n_blocks * bb
    if b_pad != B:
        x = jnp.pad(x, ((0, b_pad - B), (0, 0), (0, 0)))

    # Fuse the three weight matrices and lane-pad to 128 columns -> one DMA,
    # one canonical MXU contraction.
    w_fused = jnp.concatenate([w_att, w_cls, w_fc], axis=1).astype(jnp.float32)
    w_fused = jnp.pad(w_fused, ((0, 0), (0, W_PAD - N_COLS)))       # (F, 128)

    # VMEM budget: double-buffered input + weight + (lane-padded) output tile
    # + matmul intermediate + slack, clamped to the chip's physical capacity.
    vmem_need = (2 * bb * T * F * 4
                 + 2 * F * W_PAD * 4
                 + 3 * bb * T * W_PAD * 4
                 + (6 << 20))
    vmem_limit = min(max(vmem_need, 32 << 20), vmem_cap)

    cost = pl.CostEstimate(
        flops=2 * b_pad * T * F * W_PAD,
        transcendentals=2 * b_pad * T,
        bytes_accessed=(b_pad * T * F + F * W_PAD + b_pad * T * N_COLS) * 4,
    )

    packed = pl.pallas_call(
        pu_iic_kernel,
        out_shape=jax.ShapeDtypeStruct((b_pad, T, N_COLS), jnp.float32),
        grid_spec=pltpu.PrefetchScalarGridSpec(
            num_scalar_prefetch=0,
            grid=(n_blocks,),
            in_specs=[
                pl.BlockSpec((bb, T, F), lambda i: (i, 0, 0)),
                pl.BlockSpec((F, W_PAD), lambda i: (0, 0)),
            ],
            out_specs=pl.BlockSpec((bb, T, N_COLS), lambda i: (i, 0, 0)),
        ),
        compiler_params=pltpu.CompilerParams(
            dimension_semantics=("parallel",),
            vmem_limit_bytes=vmem_limit,
        ),
        cost_estimate=cost,
    )(x, w_fused)

    # Unpack to the PyTorch return signature: ax (B,1), rx (B,T,1), out (B,2).
    rx = packed[:B, :, 0:1]
    ax = packed[:B, 0, 1:2]
    out = packed[:B, 0, 2:2 + NUM_CLS] + b_fc[0]     # fc1 bias applied host-side
    return ax, rx, out


def pu_iic_reference(x, w_att, w_cls, w_fc, b_fc):
    """Pure-JAX reference of the same forward, for correctness checking."""
    logits = jnp.einsum('btf,fo->bto', x, w_att)
    att = jax.nn.softmax(logits, axis=1)
    rx = jax.nn.sigmoid(jnp.einsum('btf,fo->bto', x, w_cls))
    rx_m = jnp.sum(att * x, axis=1)                 # (B, F)
    ax = jnp.sum(att * rx, axis=1)                  # (B, 1)
    out = rx_m @ w_fc + b_fc[0]                     # (B, 2)
    return ax, rx, out


def _check(got, ref):
    for g, r in zip(got, ref):
        np.testing.assert_allclose(np.asarray(g), np.asarray(r),
                                   rtol=2e-3, atol=2e-3)


if __name__ == "__main__":
    key = jax.random.PRNGKey(0)
    k_x, k_wa, k_wc, k_wf, k_bf = jax.random.split(key, 5)

    B = 2
    x = jax.random.normal(k_x, (B, T, F), dtype=jnp.float32)

    # Deterministic synthetic parameters (PyTorch-Linear-like fan-in scaling).
    scale = 1.0 / np.sqrt(F)
    w_att = jax.random.normal(k_wa, (F, 1), dtype=jnp.float32) * scale
    w_cls = jax.random.normal(k_wc, (F, 1), dtype=jnp.float32) * scale
    w_fc = jax.random.uniform(k_wf, (F, NUM_CLS), dtype=jnp.float32,
                              minval=-scale, maxval=scale)
    b_fc = jax.random.uniform(k_bf, (1, NUM_CLS), dtype=jnp.float32,
                              minval=-scale, maxval=scale)

    # 1) Tiny batch, single grid step.
    res = pu_iic_forward(x, w_att, w_cls, w_fc, b_fc)
    jax.block_until_ready(res)
    _check(res, pu_iic_reference(x, w_att, w_cls, w_fc, b_fc))

    # 2) Multi-step grid + batch padding with a small explicit block size.
    B2 = 20
    x2 = jax.random.normal(jax.random.PRNGKey(1), (B2, T, F), dtype=jnp.float32)
    res2 = pu_iic_forward(x2, w_att, w_cls, w_fc, b_fc, videos_per_block=8)
    jax.block_until_ready(res2)
    _check(res2, pu_iic_reference(x2, w_att, w_cls, w_fc, b_fc))

    # 3) Default (large-block) path: even split + >=2 grid steps for megacore.
    B3 = 40
    x3 = jax.random.normal(jax.random.PRNGKey(2), (B3, T, F), dtype=jnp.float32)
    res3 = pu_iic_forward(x3, w_att, w_cls, w_fc, b_fc)
    jax.block_until_ready(res3)
    _check(res3, pu_iic_reference(x3, w_att, w_cls, w_fc, b_fc))

    print("KERNEL_OK")
</pallas_src>

<mosaic_0001>
module attributes {stable_mosaic.version = 11 : i64} {
  func.func @pu_iic_kernel(%arg0: i32, %arg1: memref<8x8x2048xf32, #tpu.memory_space<vmem>>, %arg2: memref<2048x128xf32, #tpu.memory_space<vmem>>, %arg3: memref<8x8x4xf32, #tpu.memory_space<vmem>>) attributes {dimension_semantics = [#tpu.dimension_semantics<parallel>], iteration_bounds = array<i64: 1>, scalar_prefetch = 0 : i64, scratch_operands = 0 : i64, tpu.core_type = #tpu.core_type<tc>, window_params = [{transform_indices = @transform_0, window_bounds = array<i64: 8, 8, 2048>}, {pipeline_mode = #tpu.pipeline_mode<synchronous>, transform_indices = @transform_1, window_bounds = array<i64: 2048, 128>}, {transform_indices = @transform_2, window_bounds = array<i64: 8, 8, 4>}]} {
    %c0 = arith.constant 0 : index
    %c0_0 = arith.constant 0 : index
    %c0_1 = arith.constant 0 : index
    %0 = vector.load %arg1[%c0, %c0_0, %c0_1] : memref<8x8x2048xf32, #tpu.memory_space<vmem>>, vector<8x8x2048xf32>
    %1 = vector.shape_cast %0 : vector<8x8x2048xf32> to vector<64x2048xf32>
    %c0_2 = arith.constant 0 : index
    %c0_3 = arith.constant 0 : index
    %2 = vector.load %arg2[%c0_2, %c0_3] : memref<2048x128xf32, #tpu.memory_space<vmem>>, vector<2048x128xf32>
    %cst = arith.constant dense<0.000000e+00> : vector<64x128xf32>
    %3 = tpu.matmul %1, %2, %cst {dimension_numbers = #tpu.dot_dimension_numbers<[1], [0], [0], [1], [0, 0, 1, 1], [], []>} : vector<64x2048xf32>, vector<2048x128xf32>, vector<64x128xf32> -> vector<64x128xf32>
    %4 = vector.extract_strided_slice %3 {offsets = [0, 0], sizes = [64, 4], strides = [1, 1]} : vector<64x128xf32> to vector<64x4xf32>
    %5 = vector.shape_cast %4 : vector<64x4xf32> to vector<8x8x4xf32>
    %6 = vector.extract_strided_slice %5 {offsets = [0, 0, 0], sizes = [8, 8, 1], strides = [1, 1, 1]} : vector<8x8x4xf32> to vector<8x8x1xf32>
    %cst_4 = arith.constant dense<0xFF800000> : vector<8x1xf32>
    %7 = vector.multi_reduction <maximumf>, %6, %cst_4 [1] : vector<8x8x1xf32> to vector<8x1xf32>
    %8 = vector.shape_cast %7 : vector<8x1xf32> to vector<8x1x1xf32>
    %9 = vector.broadcast %8 : vector<8x1x1xf32> to vector<8x8x1xf32>
    %10 = arith.subf %6, %9 : vector<8x8x1xf32>
    %11 = math.exp %10 : vector<8x8x1xf32>
    %cst_5 = arith.constant dense<0.000000e+00> : vector<8x1xf32>
    %12 = vector.multi_reduction <add>, %11, %cst_5 [1] : vector<8x8x1xf32> to vector<8x1xf32>
    %13 = vector.shape_cast %12 : vector<8x1xf32> to vector<8x1x1xf32>
    %14 = vector.broadcast %13 : vector<8x1x1xf32> to vector<8x8x1xf32>
    %15 = arith.divf %11, %14 : vector<8x8x1xf32>
    %16 = vector.extract_strided_slice %5 {offsets = [0, 0, 1], sizes = [8, 8, 1], strides = [1, 1, 1]} : vector<8x8x4xf32> to vector<8x8x1xf32>
    %17 = arith.negf %16 : vector<8x8x1xf32>
    %18 = math.exp %17 : vector<8x8x1xf32>
    %cst_6 = arith.constant 1.000000e+00 : f32
    %19 = vector.broadcast %cst_6 : f32 to vector<8x8x1xf32>
    %20 = arith.addf %19, %18 : vector<8x8x1xf32>
    %21 = arith.divf %19, %20 : vector<8x8x1xf32>
    %22 = arith.mulf %15, %21 : vector<8x8x1xf32>
    %cst_7 = arith.constant dense<0.000000e+00> : vector<8x1xf32>
    %23 = vector.multi_reduction <add>, %22, %cst_7 [1] : vector<8x8x1xf32> to vector<8x1xf32>
    %24 = vector.shape_cast %23 : vector<8x1xf32> to vector<8x1x1xf32>
    %25 = vector.extract_strided_slice %5 {offsets = [0, 0, 2], sizes = [8, 8, 2], strides = [1, 1, 1]} : vector<8x8x4xf32> to vector<8x8x2xf32>
    %26 = vector.broadcast %15 : vector<8x8x1xf32> to vector<8x8x2xf32>
    %27 = arith.mulf %26, %25 : vector<8x8x2xf32>
    %cst_8 = arith.constant dense<0.000000e+00> : vector<8x2xf32>
    %28 = vector.multi_reduction <add>, %27, %cst_8 [1] : vector<8x8x2xf32> to vector<8x2xf32>
    %29 = vector.shape_cast %28 : vector<8x2xf32> to vector<8x1x2xf32>
    %30 = vector.shape_cast %24 : vector<8x1x1xf32> to vector<8x1x1xf32>
    %31 = vector.broadcast %30 : vector<8x1x1xf32> to vector<8x8x1xf32>
    %32 = vector.shape_cast %29 : vector<8x1x2xf32> to vector<8x1x2xf32>
    %33 = vector.broadcast %32 : vector<8x1x2xf32> to vector<8x8x2xf32>
    %34 = tpu.concatenate %21, %31, %33 in 2 : vector<8x8x1xf32>, vector<8x8x1xf32>, vector<8x8x2xf32> -> vector<8x8x4xf32>
    %c0_9 = arith.constant 0 : index
    %c0_10 = arith.constant 0 : index
    %c0_11 = arith.constant 0 : index
    %35 = vector.load %arg3[%c0_9, %c0_10, %c0_11] : memref<8x8x4xf32, #tpu.memory_space<vmem>>, vector<8x8x4xf32>
    tpu.vector_store %arg3[%c0_9, %c0_10, %c0_11], %34 {strides = array<i32>} : memref<8x8x4xf32, #tpu.memory_space<vmem>>, vector<8x8x4xf32>,
    return
  }
  func.func @transform_0(%arg0: i32) -> (i32, i32, i32) {
    %c0_i32 = arith.constant 0 : i32
    %c0_i32_0 = arith.constant 0 : i32
    %c0_i32_1 = arith.constant 0 : i32
    return %arg0, %c0_i32, %c0_i32_0 : i32, i32, i32
  }
  func.func @transform_1(%arg0: i32) -> (i32, i32) {
    %c0_i32 = arith.constant 0 : i32
    %c0_i32_0 = arith.constant 0 : i32
    %c0_i32_1 = arith.constant 0 : i32
    return %c0_i32, %c0_i32_0 : i32, i32
  }
  func.func @transform_2(%arg0: i32) -> (i32, i32, i32) {
    %c0_i32 = arith.constant 0 : i32
    %c0_i32_0 = arith.constant 0 : i32
    %c0_i32_1 = arith.constant 0 : i32
    return %arg0, %c0_i32, %c0_i32_0 : i32, i32, i32
  }
}

</mosaic_0001>

<llo_original>
// kernel: tpu_custom_call.1
$region0: #{tpu_custom_call.1}
  #allocation0 [shape = 'u32[]', space=smem, size = 0x4, offset = 0x4, fixed_abs, tag = 'smem constant byte address 0x4 - core index']
  #allocation1 [shape = 'u32[144,128]{1,0:T(1,128)}', space=vmem, size = 0x12000, scoped, tag = 'internal scratch']
  %s0 = inlined_call_operand.hbm [shape: f32[8,8,2048], index: 0, kind: input, shape index: {}]
  %s1 = inlined_call_operand.hbm [shape: f32[2048,128], index: 1, kind: input, shape index: {}]
  %s2 = inlined_call_operand.vmem [shape: f32[8,8,4], index: 2, kind: output, shape index: {}]
  %s3 = sld [smem:[#allocation0]]
  $region26: #{tpu_custom_call.1} parent=0
    _
  %s5 = ssub.s32 1, %s3
  %s6 = scalar_select 0, %s5, %s3
  $region1: #{tpu_custom_call.1} parent=0
    #allocation2 [shape = 'u8[524288]{0}', space=vmem, size = 0x80000, scoped, tag = 'input window, operand 0, single buffered']
    #allocation3 [shape = 's32[1]{0}', space=sflag, size = 0x4, scoped, tag = 'scoped memory for tpu_custom_call.1']
    #allocation4 [shape = 'u8[1048576]{0}', space=vmem, size = 0x100000, scoped, tag = 'input window, operand 1, single buffered']
    #allocation5 [shape = 's32[1]{0}', space=sflag, size = 0x4, scoped, tag = 'scoped memory for tpu_custom_call.1']
    %7 = vsyncpa [#allocation3], 0
    %8 = vsyncpa [#allocation5], 0
    // Predicated region
    $region2: #{tpu_custom_call.1} parent=1 // pred_check
      _
    $region3: #{tpu_custom_call.1} parent=1 // pred_check_branch
      %10 = sbr.rel (0) target = $region5
    $region4: #{tpu_custom_call.1} parent=1 // pred_region
      %s12 = ssub.s32 16384, 16384
      %13 = vsyncadd [#allocation3], %s12
      %s14 = sshll.u32 [#allocation2], 4
      %s15 = int_to_ptr.vmem [resolvable:$true] %s14
      %20 = dma.hbm_to_vmem [thread:$0]  %s0, 16384, %s15, [#allocation3], 2048, 2048, 128
    $region5: #{tpu_custom_call.1} parent=1 // pred_fallthru
      _
    // Predicated region
    $region6: #{tpu_custom_call.1} parent=1 // pred_check
      _
    $region7: #{tpu_custom_call.1} parent=1 // pred_check_branch
      %22 = sbr.rel (0) target = $region9
    $region8: #{tpu_custom_call.1} parent=1 // pred_region
      %s24 = ssub.s32 32768, 32768
      %25 = vsyncadd [#allocation5], %s24
      %s26 = sshll.u32 [#allocation4], 4
      %s27 = int_to_ptr.vmem [resolvable:$true] %s26
      %32 = dma.hbm_to_vmem [thread:$0]  %s1, 32768, %s27, [#allocation5], 128, 128, 8
    $region9: #{tpu_custom_call.1} parent=1 // pred_fallthru
      _
    // Predicated region
    $region10: #{tpu_custom_call.1} parent=1 // pred_check
      _
    $region11: #{tpu_custom_call.1} parent=1 // pred_check_branch
      %34 = sbr.rel (0) target = $region13
    $region12: #{tpu_custom_call.1} parent=1 // pred_region
      %35 = dma.done [#allocation3], 16384
    $region13: #{tpu_custom_call.1} parent=1 // pred_fallthru
      _
    // Predicated region
    $region14: #{tpu_custom_call.1} parent=1 // pred_check
      _
    $region15: #{tpu_custom_call.1} parent=1 // pred_check_branch
      %37 = sbr.rel (0) target = $region17
    $region16: #{tpu_custom_call.1} parent=1 // pred_region
      %38 = dma.done [#allocation5], 32768
    $region17: #{tpu_custom_call.1} parent=1 // pred_fallthru
      _
    %v39 = vld [vmem:[#allocation2] sm:$0xff]
    %v40 = vld [vmem:[#allocation2 + $0x8] sm:$0xff]
    %v41 = vld [vmem:[#allocation2 + $0x10] sm:$0xff]
    %v42 = vld [vmem:[#allocation2 + $0x18] sm:$0xff]
    %v43 = vld [vmem:[#allocation2 + $0x20] sm:$0xff]
    %v44 = vld [vmem:[#allocation2 + $0x28] sm:$0xff]
    %v45 = vld [vmem:[#allocation2 + $0x30] sm:$0xff]
    %v46 = vld [vmem:[#allocation2 + $0x38] sm:$0xff]
    %v47 = vld [vmem:[#allocation2 + $0x40] sm:$0xff]
    %v48 = vld [vmem:[#allocation2 + $0x48] sm:$0xff]
    %v49 = vld [vmem:[#allocation2 + $0x50] sm:$0xff]
    %v50 = vld [vmem:[#allocation2 + $0x58] sm:$0xff]
    %v51 = vld [vmem:[#allocation2 + $0x60] sm:$0xff]
    %v52 = vld [vmem:[#allocation2 + $0x68] sm:$0xff]
    %v53 = vld [vmem:[#allocation2 + $0x70] sm:$0xff]
    %v54 = vld [vmem:[#allocation2 + $0x78] sm:$0xff]
    %v55 = vld [vmem:[#allocation2 + $0x80] sm:$0xff]
    %v56 = vld [vmem:[#allocation2 + $0x88] sm:$0xff]
    %v57 = vld [vmem:[#allocation2 + $0x90] sm:$0xff]
    %v58 = vld [vmem:[#allocation2 + $0x98] sm:$0xff]
    %v59 = vld [vmem:[#allocation2 + $0xa0] sm:$0xff]
    %v60 = vld [vmem:[#allocation2 + $0xa8] sm:$0xff]
    %v61 = vld [vmem:[#allocation2 + $0xb0] sm:$0xff]
    %v62 = vld [vmem:[#allocation2 + $0xb8] sm:$0xff]
    %v63 = vld [vmem:[#allocation2 + $0xc0] sm:$0xff]
    %v64 = vld [vmem:[#allocation2 + $0xc8] sm:$0xff]
    %v65 = vld [vmem:[#allocation2 + $0xd0] sm:$0xff]
    %v66 = vld [vmem:[#allocation2 + $0xd8] sm:$0xff]
    %v67 = vld [vmem:[#allocation2 + $0xe0] sm:$0xff]
    %v68 = vld [vmem:[#allocation2 + $0xe8] sm:$0xff]
    %v69 = vld [vmem:[#allocation2 + $0xf0] sm:$0xff]
    %v70 = vld [vmem:[#allocation2 + $0xf8] sm:$0xff]
    %v71 = vld [vmem:[#allocation2 + $0x100] sm:$0xff]
    %v72 = vld [vmem:[#allocation2 + $0x108] sm:$0xff]
    %v73 = vld [vmem:[#allocation2 + $0x110] sm:$0xff]
    %v74 = vld [vmem:[#allocation2 + $0x118] sm:$0xff]
    %v75 = vld [vmem:[#allocation2 + $0x120] sm:$0xff]
    %v76 = vld [vmem:[#allocation2 + $0x128] sm:$0xff]
    %v77 = vld [vmem:[#allocation2 + $0x130] sm:$0xff]
    %v78 = vld [vmem:[#allocation2 + $0x138] sm:$0xff]
    %v79 = vld [vmem:[#allocation2 + $0x140] sm:$0xff]
    %v80 = vld [vmem:[#allocation2 + $0x148] sm:$0xff]
    %v81 = vld [vmem:[#allocation2 + $0x150] sm:$0xff]
    %v82 = vld [vmem:[#allocation2 + $0x158] sm:$0xff]
    %v83 = vld [vmem:[#allocation2 + $0x160] sm:$0xff]
    %v84 = vld [vmem:[#allocation2 + $0x168] sm:$0xff]
    %v85 = vld [vmem:[#allocation2 + $0x170] sm:$0xff]
    %v86 = vld [vmem:[#allocation2 + $0x178] sm:$0xff]
    %v87 = vld [vmem:[#allocation2 + $0x180] sm:$0xff]
    %v88 = vld [vmem:[#allocation2 + $0x188] sm:$0xff]
    %v89 = vld [vmem:[#allocation2 + $0x190] sm:$0xff]
    %v90 = vld [vmem:[#allocation2 + $0x198] sm:$0xff]
    %v91 = vld [vmem:[#allocation2 + $0x1a0] sm:$0xff]
    %v92 = vld [vmem:[#allocation2 + $0x1a8] sm:$0xff]
    %v93 = vld [vmem:[#allocation2 + $0x1b0] sm:$0xff]
    %v94 = vld [vmem:[#allocation2 + $0x1b8] sm:$0xff]
    %v95 = vld [vmem:[#allocation2 + $0x1c0] sm:$0xff]
    %v96 = vld [vmem:[#allocation2 + $0x1c8] sm:$0xff]
    %v97 = vld [vmem:[#allocation2 + $0x1d0] sm:$0xff]
    %v98 = vld [vmem:[#allocation2 + $0x1d8] sm:$0xff]
    %v99 = vld [vmem:[#allocation2 + $0x1e0] sm:$0xff]
    %v100 = vld [vmem:[#allocation2 + $0x1e8] sm:$0xff]
    %v101 = vld [vmem:[#allocation2 + $0x1f0] sm:$0xff]
    %v102 = vld [vmem:[#allocation2 + $0x1f8] sm:$0xff]
    %v103 = vld [vmem:[#allocation2 + $0x200] sm:$0xff]
    %v104 = vld [vmem:[#allocation2 + $0x208] sm:$0xff]
    %v105 = vld [vmem:[#allocation2 + $0x210] sm:$0xff]
    %v106 = vld [vmem:[#allocation2 + $0x218] sm:$0xff]
    %v107 = vld [vmem:[#allocation2 + $0x220] sm:$0xff]
    %v108 = vld [vmem:[#allocation2 + $0x228] sm:$0xff]
    %v109 = vld [vmem:[#allocation2 + $0x230] sm:$0xff]
    %v110 = vld [vmem:[#allocation2 + $0x238] sm:$0xff]
    %v111 = vld [vmem:[#allocation2 + $0x240] sm:$0xff]
    %v112 = vld [vmem:[#allocation2 + $0x248] sm:$0xff]
    %v113 = vld [vmem:[#allocation2 + $0x250] sm:$0xff]
    %v114 = vld [vmem:[#allocation2 + $0x258] sm:$0xff]
    %v115 = vld [vmem:[#allocation2 + $0x260] sm:$0xff]
    %v116 = vld [vmem:[#allocation2 + $0x268] sm:$0xff]
    %v117 = vld [vmem:[#allocation2 + $0x270] sm:$0xff]
    %v118 = vld [vmem:[#allocation2 + $0x278] sm:$0xff]
    %v119 = vld [vmem:[#allocation2 + $0x280] sm:$0xff]
    %v120 = vld [vmem:[#allocation2 + $0x288] sm:$0xff]
    %v121 = vld [vmem:[#allocation2 + $0x290] sm:$0xff]
    %v122 = vld [vmem:[#allocation2 + $0x298] sm:$0xff]
    %v123 = vld [vmem:[#allocation2 + $0x2a0] sm:$0xff]
    %v124 = vld [vmem:[#allocation2 + $0x2a8] sm:$0xff]
    %v125 = vld [vmem:[#allocation2 + $0x2b0] sm:$0xff]
    %v126 = vld [vmem:[#allocation2 + $0x2b8] sm:$0xff]
    %v127 = vld [vmem:[#allocation2 + $0x2c0] sm:$0xff]
    %v128 = vld [vmem:[#allocation2 + $0x2c8] sm:$0xff]
    %v129 = vld [vmem:[#allocation2 + $0x2d0] sm:$0xff]
    %v130 = vld [vmem:[#allocation2 + $0x2d8] sm:$0xff]
    %v131 = vld [vmem:[#allocation2 + $0x2e0] sm:$0xff]
    %v132 = vld [vmem:[#allocation2 + $0x2e8] sm:$0xff]
    %v133 = vld [vmem:[#allocation2 + $0x2f0] sm:$0xff]
    %v134 = vld [vmem:[#allocation2 + $0x2f8] sm:$0xff]
    %v135 = vld [vmem:[#allocation2 + $0x300] sm:$0xff]
    %v136 = vld [vmem:[#allocation2 + $0x308] sm:$0xff]
    %v137 = vld [vmem:[#allocation2 + $0x310] sm:$0xff]
    %v138 = vld [vmem:[#allocation2 + $0x318] sm:$0xff]
    %v139 = vld [vmem:[#allocation2 + $0x320] sm:$0xff]
    %v140 = vld [vmem:[#allocation2 + $0x328] sm:$0xff]
    %v141 = vld [vmem:[#allocation2 + $0x330] sm:$0xff]
    %v142 = vld [vmem:[#allocation2 + $0x338] sm:$0xff]
    %v143 = vld [vmem:[#allocation2 + $0x340] sm:$0xff]
    %v144 = vld [vmem:[#allocation2 + $0x348] sm:$0xff]
    %v145 = vld [vmem:[#allocation2 + $0x350] sm:$0xff]
    %v146 = vld [vmem:[#allocation2 + $0x358] sm:$0xff]
    %v147 = vld [vmem:[#allocation2 + $0x360] sm:$0xff]
    %v148 = vld [vmem:[#allocation2 + $0x368] sm:$0xff]
    %v149 = vld [vmem:[#allocation2 + $0x370] sm:$0xff]
    %v150 = vld [vmem:[#allocation2 + $0x378] sm:$0xff]
    %v151 = vld [vmem:[#allocation2 + $0x380] sm:$0xff]
    %v152 = vld [vmem:[#allocation2 + $0x388] sm:$0xff]
    %v153 = vld [vmem:[#allocation2 + $0x390] sm:$0xff]
    %v154 = vld [vmem:[#allocation2 + $0x398] sm:$0xff]
    %v155 = vld [vmem:[#allocation2 + $0x3a0] sm:$0xff]
    %v156 = vld [vmem:[#allocation2 + $0x3a8] sm:$0xff]
    %v157 = vld [vmem:[#allocation2 + $0x3b0] sm:$0xff]
    %v158 = vld [vmem:[#allocation2 + $0x3b8] sm:$0xff]
    %v159 = vld [vmem:[#allocation2 + $0x3c0] sm:$0xff]
    %v160 = vld [vmem:[#allocation2 + $0x3c8] sm:$0xff]
    %v161 = vld [vmem:[#allocation2 + $0x3d0] sm:$0xff]
    %v162 = vld [vmem:[#allocation2 + $0x3d8] sm:$0xff]
    %v163 = vld [vmem:[#allocation2 + $0x3e0] sm:$0xff]
    %v164 = vld [vmem:[#allocation2 + $0x3e8] sm:$0xff]
    %v165 = vld [vmem:[#allocation2 + $0x3f0] sm:$0xff]
    %v166 = vld [vmem:[#allocation2 + $0x3f8] sm:$0xff]
    %v167 = vld [vmem:[#allocation4] sm:$0xff]
    %v168 = vld [vmem:[#allocation4 + $0x8] sm:$0xff]
    %v169 = vld [vmem:[#allocation4 + $0x10] sm:$0xff]
    %v170 = vld [vmem:[#allocation4 + $0x18] sm:$0xff]
    %v171 = vld [vmem:[#allocation4 + $0x20] sm:$0xff]
    %v172 = vld [vmem:[#allocation4 + $0x28] sm:$0xff]
    %v173 = vld [vmem:[#allocation4 + $0x30] sm:$0xff]
    %v174 = vld [vmem:[#allocation4 + $0x38] sm:$0xff]
    %v175 = vld [vmem:[#allocation4 + $0x40] sm:$0xff]
    %v176 = vld [vmem:[#allocation4 + $0x48] sm:$0xff]
    %v177 = vld [vmem:[#allocation4 + $0x50] sm:$0xff]
    %v178 = vld [vmem:[#allocation4 + $0x58] sm:$0xff]
    %v179 = vld [vmem:[#allocation4 + $0x60] sm:$0xff]
    %v180 = vld [vmem:[#allocation4 + $0x68] sm:$0xff]
    %v181 = vld [vmem:[#allocation4 + $0x70] sm:$0xff]
    %v182 = vld [vmem:[#allocation4 + $0x78] sm:$0xff]
    %v183 = vld [vmem:[#allocation4 + $0x80] sm:$0xff]
    %v184 = vld [vmem:[#allocation4 + $0x88] sm:$0xff]
    %v185 = vld [vmem:[#allocation4 + $0x90] sm:$0xff]
    %v186 = vld [vmem:[#allocation4 + $0x98] sm:$0xff]
    %v187 = vld [vmem:[#allocation4 + $0xa0] sm:$0xff]
    %v188 = vld [vmem:[#allocation4 + $0xa8] sm:$0xff]
    %v189 = vld [vmem:[#allocation4 + $0xb0] sm:$0xff]
    %v190 = vld [vmem:[#allocation4 + $0xb8] sm:$0xff]
    %v191 = vld [vmem:[#allocation4 + $0xc0] sm:$0xff]
    %v192 = vld [vmem:[#allocation4 + $0xc8] sm:$0xff]
    %v193 = vld [vmem:[#allocation4 + $0xd0] sm:$0xff]
    %v194 = vld [vmem:[#allocation4 + $0xd8] sm:$0xff]
    %v195 = vld [vmem:[#allocation4 + $0xe0] sm:$0xff]
    %v196 = vld [vmem:[#allocation4 + $0xe8] sm:$0xff]
    %v197 = vld [vmem:[#allocation4 + $0xf0] sm:$0xff]
    %v198 = vld [vmem:[#allocation4 + $0xf8] sm:$0xff]
    %v199 = vld [vmem:[#allocation4 + $0x100] sm:$0xff]
    %v200 = vld [vmem:[#allocation4 + $0x108] sm:$0xff]
    %v201 = vld [vmem:[#allocation4 + $0x110] sm:$0xff]
    %v202 = vld [vmem:[#allocation4 + $0x118] sm:$0xff]
    %v203 = vld [vmem:[#allocation4 + $0x120] sm:$0xff]
    %v204 = vld [vmem:[#allocation4 + $0x128] sm:$0xff]
    %v205 = vld [vmem:[#allocation4 + $0x130] sm:$0xff]
    %v206 = vld [vmem:[#allocation4 + $0x138] sm:$0xff]
    %v207 = vld [vmem:[#allocation4 + $0x140] sm:$0xff]
    %v208 = vld [vmem:[#allocation4 + $0x148] sm:$0xff]
    %v209 = vld [vmem:[#allocation4 + $0x150] sm:$0xff]
    %v210 = vld [vmem:[#allocation4 + $0x158] sm:$0xff]
    %v211 = vld [vmem:[#allocation4 + $0x160] sm:$0xff]
    %v212 = vld [vmem:[#allocation4 + $0x168] sm:$0xff]
    %v213 = vld [vmem:[#allocation4 + $0x170] sm:$0xff]
    %v214 = vld [vmem:[#allocation4 + $0x178] sm:$0xff]
    %v215 = vld [vmem:[#allocation4 + $0x180] sm:$0xff]
    %v216 = vld [vmem:[#allocation4 + $0x188] sm:$0xff]
    %v217 = vld [vmem:[#allocation4 + $0x190] sm:$0xff]
    %v218 = vld [vmem:[#allocation4 + $0x198] sm:$0xff]
    %v219 = vld [vmem:[#allocation4 + $0x1a0] sm:$0xff]
    %v220 = vld [vmem:[#allocation4 + $0x1a8] sm:$0xff]
    %v221 = vld [vmem:[#allocation4 + $0x1b0] sm:$0xff]
    %v222 = vld [vmem:[#allocation4 + $0x1b8] sm:$0xff]
    %v223 = vld [vmem:[#allocation4 + $0x1c0] sm:$0xff]
    %v224 = vld [vmem:[#allocation4 + $0x1c8] sm:$0xff]
    %v225 = vld [vmem:[#allocation4 + $0x1d0] sm:$0xff]
    %v226 = vld [vmem:[#allocation4 + $0x1d8] sm:$0xff]
    %v227 = vld [vmem:[#allocation4 + $0x1e0] sm:$0xff]
    %v228 = vld [vmem:[#allocation4 + $0x1e8] sm:$0xff]
    %v229 = vld [vmem:[#allocation4 + $0x1f0] sm:$0xff]
    %v230 = vld [vmem:[#allocation4 + $0x1f8] sm:$0xff]
    %v231 = vld [vmem:[#allocation4 + $0x200] sm:$0xff]
    %v232 = vld [vmem:[#allocation4 + $0x208] sm:$0xff]
    %v233 = vld [vmem:[#allocation4 + $0x210] sm:$0xff]
    %v234 = vld [vmem:[#allocation4 + $0x218] sm:$0xff]
    %v235 = vld [vmem:[#allocation4 + $0x220] sm:$0xff]
    %v236 = vld [vmem:[#allocation4 + $0x228] sm:$0xff]
    %v237 = vld [vmem:[#allocation4 + $0x230] sm:$0xff]
    %v238 = vld [vmem:[#allocation4 + $0x238] sm:$0xff]
    %v239 = vld [vmem:[#allocation4 + $0x240] sm:$0xff]
    %v240 = vld [vmem:[#allocation4 + $0x248] sm:$0xff]
    %v241 = vld [vmem:[#allocation4 + $0x250] sm:$0xff]
    %v242 = vld [vmem:[#allocation4 + $0x258] sm:$0xff]
    %v243 = vld [vmem:[#allocation4 + $0x260] sm:$0xff]
    %v244 = vld [vmem:[#allocation4 + $0x268] sm:$0xff]
    %v245 = vld [vmem:[#allocation4 + $0x270] sm:$0xff]
    %v246 = vld [vmem:[#allocation4 + $0x278] sm:$0xff]
    %v247 = vld [vmem:[#allocation4 + $0x280] sm:$0xff]
    %v248 = vld [vmem:[#allocation4 + $0x288] sm:$0xff]
    %v249 = vld [vmem:[#allocation4 + $0x290] sm:$0xff]
    %v250 = vld [vmem:[#allocation4 + $0x298] sm:$0xff]
    %v251 = vld [vmem:[#allocation4 + $0x2a0] sm:$0xff]
    %v252 = vld [vmem:[#allocation4 + $0x2a8] sm:$0xff]
    %v253 = vld [vmem:[#allocation4 + $0x2b0] sm:$0xff]
    %v254 = vld [vmem:[#allocation4 + $0x2b8] sm:$0xff]
    %v255 = vld [vmem:[#allocation4 + $0x2c0] sm:$0xff]
    %v256 = vld [vmem:[#allocation4 + $0x2c8] sm:$0xff]
    %v257 = vld [vmem:[#allocation4 + $0x2d0] sm:$0xff]
    %v258 = vld [vmem:[#allocation4 + $0x2d8] sm:$0xff]
    %v259 = vld [vmem:[#allocation4 + $0x2e0] sm:$0xff]
    %v260 = vld [vmem:[#allocation4 + $0x2e8] sm:$0xff]
    %v261 = vld [vmem:[#allocation4 + $0x2f0] sm:$0xff]
    %v262 = vld [vmem:[#allocation4 + $0x2f8] sm:$0xff]
    %v263 = vld [vmem:[#allocation4 + $0x300] sm:$0xff]
    %v264 = vld [vmem:[#allocation4 + $0x308] sm:$0xff]
    %v265 = vld [vmem:[#allocation4 + $0x310] sm:$0xff]
    %v266 = vld [vmem:[#allocation4 + $0x318] sm:$0xff]
    %v267 = vld [vmem:[#allocation4 + $0x320] sm:$0xff]
    %v268 = vld [vmem:[#allocation4 + $0x328] sm:$0xff]
    %v269 = vld [vmem:[#allocation4 + $0x330] sm:$0xff]
    %v270 = vld [vmem:[#allocation4 + $0x338] sm:$0xff]
    %v271 = vld [vmem:[#allocation4 + $0x340] sm:$0xff]
    %v272 = vld [vmem:[#allocation4 + $0x348] sm:$0xff]
    %v273 = vld [vmem:[#allocation4 + $0x350] sm:$0xff]
    %v274 = vld [vmem:[#allocation4 + $0x358] sm:$0xff]
    %v275 = vld [vmem:[#allocation4 + $0x360] sm:$0xff]
    %v276 = vld [vmem:[#allocation4 + $0x368] sm:$0xff]
    %v277 = vld [vmem:[#allocation4 + $0x370] sm:$0xff]
    %v278 = vld [vmem:[#allocation4 + $0x378] sm:$0xff]
    %v279 = vld [vmem:[#allocation4 + $0x380] sm:$0xff]
    %v280 = vld [vmem:[#allocation4 + $0x388] sm:$0xff]
    %v281 = vld [vmem:[#allocation4 + $0x390] sm:$0xff]
    %v282 = vld [vmem:[#allocation4 + $0x398] sm:$0xff]
    %v283 = vld [vmem:[#allocation4 + $0x3a0] sm:$0xff]
    %v284 = vld [vmem:[#allocation4 + $0x3a8] sm:$0xff]
    %v285 = vld [vmem:[#allocation4 + $0x3b0] sm:$0xff]
    %v286 = vld [vmem:[#allocation4 + $0x3b8] sm:$0xff]
    %v287 = vld [vmem:[#allocation4 + $0x3c0] sm:$0xff]
    %v288 = vld [vmem:[#allocation4 + $0x3c8] sm:$0xff]
    %v289 = vld [vmem:[#allocation4 + $0x3d0] sm:$0xff]
    %v290 = vld [vmem:[#allocation4 + $0x3d8] sm:$0xff]
    %v291 = vld [vmem:[#allocation4 + $0x3e0] sm:$0xff]
    %v292 = vld [vmem:[#allocation4 + $0x3e8] sm:$0xff]
    %v293 = vld [vmem:[#allocation4 + $0x3f0] sm:$0xff]
    %v294 = vld [vmem:[#allocation4 + $0x3f8] sm:$0xff]
    %v295 = vld [vmem:[#allocation4 + $0x400] sm:$0xff]
    %v296 = vld [vmem:[#allocation4 + $0x408] sm:$0xff]
    %v297 = vld [vmem:[#allocation4 + $0x410] sm:$0xff]
    %v298 = vld [vmem:[#allocation4 + $0x418] sm:$0xff]
    %v299 = vld [vmem:[#allocation4 + $0x420] sm:$0xff]
    %v300 = vld [vmem:[#allocation4 + $0x428] sm:$0xff]
    %v301 = vld [vmem:[#allocation4 + $0x430] sm:$0xff]
    %v302 = vld [vmem:[#allocation4 + $0x438] sm:$0xff]
    %v303 = vld [vmem:[#allocation4 + $0x440] sm:$0xff]
    %v304 = vld [vmem:[#allocation4 + $0x448] sm:$0xff]
    %v305 = vld [vmem:[#allocation4 + $0x450] sm:$0xff]
    %v306 = vld [vmem:[#allocation4 + $0x458] sm:$0xff]
    %v307 = vld [vmem:[#allocation4 + $0x460] sm:$0xff]
    %v308 = vld [vmem:[#allocation4 + $0x468] sm:$0xff]
    %v309 = vld [vmem:[#allocation4 + $0x470] sm:$0xff]
    %v310 = vld [vmem:[#allocation4 + $0x478] sm:$0xff]
    %v311 = vld [vmem:[#allocation4 + $0x480] sm:$0xff]
    %v312 = vld [vmem:[#allocation4 + $0x488] sm:$0xff]
    %v313 = vld [vmem:[#allocation4 + $0x490] sm:$0xff]
    %v314 = vld [vmem:[#allocation4 + $0x498] sm:$0xff]
    %v315 = vld [vmem:[#allocation4 + $0x4a0] sm:$0xff]
    %v316 = vld [vmem:[#allocation4 + $0x4a8] sm:$0xff]
    %v317 = vld [vmem:[#allocation4 + $0x4b0] sm:$0xff]
    %v318 = vld [vmem:[#allocation4 + $0x4b8] sm:$0xff]
    %v319 = vld [vmem:[#allocation4 + $0x4c0] sm:$0xff]
    %v320 = vld [vmem:[#allocation4 + $0x4c8] sm:$0xff]
    %v321 = vld [vmem:[#allocation4 + $0x4d0] sm:$0xff]
    %v322 = vld [vmem:[#allocation4 + $0x4d8] sm:$0xff]
    %v323 = vld [vmem:[#allocation4 + $0x4e0] sm:$0xff]
    %v324 = vld [vmem:[#allocation4 + $0x4e8] sm:$0xff]
    %v325 = vld [vmem:[#allocation4 + $0x4f0] sm:$0xff]
    %v326 = vld [vmem:[#allocation4 + $0x4f8] sm:$0xff]
    %v327 = vld [vmem:[#allocation4 + $0x500] sm:$0xff]
    %v328 = vld [vmem:[#allocation4 + $0x508] sm:$0xff]
    %v329 = vld [vmem:[#allocation4 + $0x510] sm:$0xff]
    %v330 = vld [vmem:[#allocation4 + $0x518] sm:$0xff]
    %v331 = vld [vmem:[#allocation4 + $0x520] sm:$0xff]
    %v332 = vld [vmem:[#allocation4 + $0x528] sm:$0xff]
    %v333 = vld [vmem:[#allocation4 + $0x530] sm:$0xff]
    %v334 = vld [vmem:[#allocation4 + $0x538] sm:$0xff]
    %v335 = vld [vmem:[#allocation4 + $0x540] sm:$0xff]
    %v336 = vld [vmem:[#allocation4 + $0x548] sm:$0xff]
    %v337 = vld [vmem:[#allocation4 + $0x550] sm:$0xff]
    %v338 = vld [vmem:[#allocation4 + $0x558] sm:$0xff]
    %v339 = vld [vmem:[#allocation4 + $0x560] sm:$0xff]
    %v340 = vld [vmem:[#allocation4 + $0x568] sm:$0xff]
    %v341 = vld [vmem:[#allocation4 + $0x570] sm:$0xff]
    %v342 = vld [vmem:[#allocation4 + $0x578] sm:$0xff]
    %v343 = vld [vmem:[#allocation4 + $0x580] sm:$0xff]
    %v344 = vld [vmem:[#allocation4 + $0x588] sm:$0xff]
    %v345 = vld [vmem:[#allocation4 + $0x590] sm:$0xff]
    %v346 = vld [vmem:[#allocation4 + $0x598] sm:$0xff]
    %v347 = vld [vmem:[#allocation4 + $0x5a0] sm:$0xff]
    %v348 = vld [vmem:[#allocation4 + $0x5a8] sm:$0xff]
    %v349 = vld [vmem:[#allocation4 + $0x5b0] sm:$0xff]
    %v350 = vld [vmem:[#allocation4 + $0x5b8] sm:$0xff]
    %v351 = vld [vmem:[#allocation4 + $0x5c0] sm:$0xff]
    %v352 = vld [vmem:[#allocation4 + $0x5c8] sm:$0xff]
    %v353 = vld [vmem:[#allocation4 + $0x5d0] sm:$0xff]
    %v354 = vld [vmem:[#allocation4 + $0x5d8] sm:$0xff]
    %v355 = vld [vmem:[#allocation4 + $0x5e0] sm:$0xff]
    %v356 = vld [vmem:[#allocation4 + $0x5e8] sm:$0xff]
    %v357 = vld [vmem:[#allocation4 + $0x5f0] sm:$0xff]
    %v358 = vld [vmem:[#allocation4 + $0x5f8] sm:$0xff]
    %v359 = vld [vmem:[#allocation4 + $0x600] sm:$0xff]
    %v360 = vld [vmem:[#allocation4 + $0x608] sm:$0xff]
    %v361 = vld [vmem:[#allocation4 + $0x610] sm:$0xff]
    %v362 = vld [vmem:[#allocation4 + $0x618] sm:$0xff]
    %v363 = vld [vmem:[#allocation4 + $0x620] sm:$0xff]
    %v364 = vld [vmem:[#allocation4 + $0x628] sm:$0xff]
    %v365 = vld [vmem:[#allocation4 + $0x630] sm:$0xff]
    %v366 = vld [vmem:[#allocation4 + $0x638] sm:$0xff]
    %v367 = vld [vmem:[#allocation4 + $0x640] sm:$0xff]
    %v368 = vld [vmem:[#allocation4 + $0x648] sm:$0xff]
    %v369 = vld [vmem:[#allocation4 + $0x650] sm:$0xff]
    %v370 = vld [vmem:[#allocation4 + $0x658] sm:$0xff]
    %v371 = vld [vmem:[#allocation4 + $0x660] sm:$0xff]
    %v372 = vld [vmem:[#allocation4 + $0x668] sm:$0xff]
    %v373 = vld [vmem:[#allocation4 + $0x670] sm:$0xff]
    %v374 = vld [vmem:[#allocation4 + $0x678] sm:$0xff]
    %v375 = vld [vmem:[#allocation4 + $0x680] sm:$0xff]
    %v376 = vld [vmem:[#allocation4 + $0x688] sm:$0xff]
    %v377 = vld [vmem:[#allocation4 + $0x690] sm:$0xff]
    %v378 = vld [vmem:[#allocation4 + $0x698] sm:$0xff]
    %v379 = vld [vmem:[#allocation4 + $0x6a0] sm:$0xff]
    %v380 = vld [vmem:[#allocation4 + $0x6a8] sm:$0xff]
    %v381 = vld [vmem:[#allocation4 + $0x6b0] sm:$0xff]
    %v382 = vld [vmem:[#allocation4 + $0x6b8] sm:$0xff]
    %v383 = vld [vmem:[#allocation4 + $0x6c0] sm:$0xff]
    %v384 = vld [vmem:[#allocation4 + $0x6c8] sm:$0xff]
    %v385 = vld [vmem:[#allocation4 + $0x6d0] sm:$0xff]
    %v386 = vld [vmem:[#allocation4 + $0x6d8] sm:$0xff]
    %v387 = vld [vmem:[#allocation4 + $0x6e0] sm:$0xff]
    %v388 = vld [vmem:[#allocation4 + $0x6e8] sm:$0xff]
    %v389 = vld [vmem:[#allocation4 + $0x6f0] sm:$0xff]
    %v390 = vld [vmem:[#allocation4 + $0x6f8] sm:$0xff]
    %v391 = vld [vmem:[#allocation4 + $0x700] sm:$0xff]
    %v392 = vld [vmem:[#allocation4 + $0x708] sm:$0xff]
    %v393 = vld [vmem:[#allocation4 + $0x710] sm:$0xff]
    %v394 = vld [vmem:[#allocation4 + $0x718] sm:$0xff]
    %v395 = vld [vmem:[#allocation4 + $0x720] sm:$0xff]
    %v396 = vld [vmem:[#allocation4 + $0x728] sm:$0xff]
    %v397 = vld [vmem:[#allocation4 + $0x730] sm:$0xff]
    %v398 = vld [vmem:[#allocation4 + $0x738] sm:$0xff]
    %v399 = vld [vmem:[#allocation4 + $0x740] sm:$0xff]
    %v400 = vld [vmem:[#allocation4 + $0x748] sm:$0xff]
    %v401 = vld [vmem:[#allocation4 + $0x750] sm:$0xff]
    %v402 = vld [vmem:[#allocation4 + $0x758] sm:$0xff]
    %v403 = vld [vmem:[#allocation4 + $0x760] sm:$0xff]
    %v404 = vld [vmem:[#allocation4 + $0x768] sm:$0xff]
    %v405 = vld [vmem:[#allocation4 + $0x770] sm:$0xff]
    %v406 = vld [vmem:[#allocation4 + $0x778] sm:$0xff]
    %v407 = vld [vmem:[#allocation4 + $0x780] sm:$0xff]
    %v408 = vld [vmem:[#allocation4 + $0x788] sm:$0xff]
    %v409 = vld [vmem:[#allocation4 + $0x790] sm:$0xff]
    %v410 = vld [vmem:[#allocation4 + $0x798] sm:$0xff]
    %v411 = vld [vmem:[#allocation4 + $0x7a0] sm:$0xff]
    %v412 = vld [vmem:[#allocation4 + $0x7a8] sm:$0xff]
    %v413 = vld [vmem:[#allocation4 + $0x7b0] sm:$0xff]
    %v414 = vld [vmem:[#allocation4 + $0x7b8] sm:$0xff]
    %v415 = vld [vmem:[#allocation4 + $0x7c0] sm:$0xff]
    %v416 = vld [vmem:[#allocation4 + $0x7c8] sm:$0xff]
    %v417 = vld [vmem:[#allocation4 + $0x7d0] sm:$0xff]
    %v418 = vld [vmem:[#allocation4 + $0x7d8] sm:$0xff]
    %v419 = vld [vmem:[#allocation4 + $0x7e0] sm:$0xff]
    %v420 = vld [vmem:[#allocation4 + $0x7e8] sm:$0xff]
    %v421 = vld [vmem:[#allocation4 + $0x7f0] sm:$0xff]
    %v422 = vld [vmem:[#allocation4 + $0x7f8] sm:$0xff]
    %423 = vmatprep.subr.mxu0 0.0
    %424 = vmatpush1.msra.mxu0 %v167
    %425 = vmatprep.subr.mxu0 0.0
    %426 = vmatpush1.msra.mxu0 %v168
    %427 = vmatprep.subr.mxu0 0.0
    %428 = vmatpush1.msra.mxu0 %v169
    %429 = vmatprep.subr.mxu0 0.0
    %430 = vmatpush1.msra.mxu0 %v170
    %431 = vmatprep.subr.mxu0 0.0
    %432 = vmatpush1.msra.mxu0 %v171
    %433 = vmatprep.subr.mxu0 0.0
    %434 = vmatpush1.msra.mxu0 %v172
    %435 = vmatprep.subr.mxu0 0.0
    %436 = vmatpush1.msra.mxu0 %v173
    %437 = vmatprep.subr.mxu0 0.0
    %438 = vmatpush1.msra.mxu0 %v174
    %439 = vmatprep.subr.mxu0 0.0
    %440 = vmatpush1.msra.mxu0 %v175
    %441 = vmatprep.subr.mxu0 0.0
    %442 = vmatpush1.msra.mxu0 %v176
    %443 = vmatprep.subr.mxu0 0.0
    %444 = vmatpush1.msra.mxu0 %v177
    %445 = vmatprep.subr.mxu0 0.0
    %446 = vmatpush1.msra.mxu0 %v178
    %447 = vmatprep.subr.mxu0 0.0
    %448 = vmatpush1.msra.mxu0 %v179
    %449 = vmatprep.subr.mxu0 0.0
    %450 = vmatpush1.msra.mxu0 %v180
    %451 = vmatprep.subr.mxu0 0.0
    %452 = vmatpush1.msra.mxu0 %v181
    %453 = vmatprep.subr.mxu0 0.0
    %454 = vmatpush1.msra.mxu0 %v182
    %455 = vmatprep.subr.mxu0 0.0
    %456 = vmatpush1.msra.mxu0 %v183
    %457 = vmatprep.subr.mxu0 0.0
    %458 = vmatpush1.msra.mxu0 %v184
    %459 = vmatprep.subr.mxu0 0.0
    %460 = vmatpush1.msra.mxu0 %v185
    %461 = vmatprep.subr.mxu0 0.0
    %462 = vmatpush1.msra.mxu0 %v186
    %463 = vmatprep.subr.mxu0 0.0
    %464 = vmatpush1.msra.mxu0 %v187
    %465 = vmatprep.subr.mxu0 0.0
    %466 = vmatpush1.msra.mxu0 %v188
    %467 = vmatprep.subr.mxu0 0.0
    %468 = vmatpush1.msra.mxu0 %v189
    %469 = vmatprep.subr.mxu0 0.0
    %470 = vmatpush1.msra.mxu0 %v190
    %471 = vmatprep.subr.mxu0 0.0
    %472 = vmatpush1.msra.mxu0 %v191
    %473 = vmatprep.subr.mxu0 0.0
    %474 = vmatpush1.msra.mxu0 %v192
    %475 = vmatprep.subr.mxu0 0.0
    %476 = vmatpush1.msra.mxu0 %v193
    %477 = vmatprep.subr.mxu0 0.0
    %478 = vmatpush1.msra.mxu0 %v194
    %479 = vmatprep.subr.mxu0 0.0
    %480 = vmatpush1.msra.mxu0 %v195
    %481 = vmatprep.subr.mxu0 0.0
    %482 = vmatpush1.msra.mxu0 %v196
    %483 = vmatprep.subr.mxu0 0.0
    %484 = vmatpush1.msra.mxu0 %v197
    %485 = vmatprep.subr.mxu0 0.0
    %486 = vmatpush1.msra.mxu0 %v198
    %487 = vmatprep.mubr.f32.mxu0 %v40
    %488 = vmatmul.mubr.f32.gmra.mrb[0].mxu0 %v39
    %v489 = vpop.f32.mrb[0].mxu0
    %v490 = vadd.f32 0.0, %v489
    %v491 = vpop.f32.mrb[0].mxu0
    %492 = vmatprep.mubr.f32.mxu0 %v56
    %493 = vmatmul.mubr.f32.gmra.mrb[0].mxu0 %v55
    %v494 = vpop.f32.mrb[0].mxu0
    %v495 = vadd.f32 0.0, %v494
    %v496 = vpop.f32.mrb[0].mxu0
    %497 = vmatprep.mubr.f32.mxu0 %v72
    %498 = vmatmul.mubr.f32.gmra.mrb[0].mxu0 %v71
    %v499 = vpop.f32.mrb[0].mxu0
    %v500 = vadd.f32 0.0, %v499
    %v501 = vpop.f32.mrb[0].mxu0
    %502 = vmatprep.mubr.f32.mxu0 %v88
    %503 = vmatmul.mubr.f32.gmra.mrb[0].mxu0 %v87
    %v504 = vpop.f32.mrb[0].mxu0
    %v505 = vadd.f32 0.0, %v504
    %v506 = vpop.f32.mrb[0].mxu0
    %507 = vmatprep.mubr.f32.mxu0 %v104
    %508 = vmatmul.mubr.f32.gmra.mrb[0].mxu0 %v103
    %v509 = vpop.f32.mrb[0].mxu0
    %v510 = vadd.f32 0.0, %v509
    %v511 = vpop.f32.mrb[0].mxu0
    %512 = vmatprep.mubr.f32.mxu0 %v120
    %513 = vmatmul.mubr.f32.gmra.mrb[0].mxu0 %v119
    %v514 = vpop.f32.mrb[0].mxu0
    %v515 = vadd.f32 0.0, %v514
    %v516 = vpop.f32.mrb[0].mxu0
    %517 = vmatprep.mubr.f32.mxu0 %v136
    %518 = vmatmul.mubr.f32.gmra.mrb[0].mxu0 %v135
    %v519 = vpop.f32.mrb[0].mxu0
    %v520 = vadd.f32 0.0, %v519
    %v521 = vpop.f32.mrb[0].mxu0
    %522 = vmatprep.mubr.f32.mxu0 %v152
    %523 = vmatmul.mubr.f32.gmra.mrb[0].mxu0 %v151
    %v524 = vpop.f32.mrb[0].mxu0
    %v525 = vadd.f32 0.0, %v524
    %v526 = vpop.f32.mrb[0].mxu0
    %527 = vdwg.mxu0
    %528 = vmatprep.subr.mxu0 0.0
    %529 = vmatpush1.msra.mxu0 %v199
    %530 = vmatprep.subr.mxu0 0.0
    %531 = vmatpush1.msra.mxu0 %v200
    %532 = vmatprep.subr.mxu0 0.0
    %533 = vmatpush1.msra.mxu0 %v201
    %534 = vmatprep.subr.mxu0 0.0
    %535 = vmatpush1.msra.mxu0 %v202
    %536 = vmatprep.subr.mxu0 0.0
    %537 = vmatpush1.msra.mxu0 %v203
    %538 = vmatprep.subr.mxu0 0.0
    %539 = vmatpush1.msra.mxu0 %v204
    %540 = vmatprep.subr.mxu0 0.0
    %541 = vmatpush1.msra.mxu0 %v205
    %542 = vmatprep.subr.mxu0 0.0
    %543 = vmatpush1.msra.mxu0 %v206
    %544 = vmatprep.subr.mxu0 0.0
    %545 = vmatpush1.msra.mxu0 %v207
    %546 = vmatprep.subr.mxu0 0.0
    %547 = vmatpush1.msra.mxu0 %v208
    %548 = vmatprep.subr.mxu0 0.0
    %549 = vmatpush1.msra.mxu0 %v209
    %550 = vmatprep.subr.mxu0 0.0
    %551 = vmatpush1.msra.mxu0 %v210
    %552 = vmatprep.subr.mxu0 0.0
    %553 = vmatpush1.msra.mxu0 %v211
    %554 = vmatprep.subr.mxu0 0.0
    %555 = vmatpush1.msra.mxu0 %v212
    %556 = vmatprep.subr.mxu0 0.0
    %557 = vmatpush1.msra.mxu0 %v213
    %558 = vmatprep.subr.mxu0 0.0
    %559 = vmatpush1.msra.mxu0 %v214
    %560 = vmatprep.subr.mxu0 0.0
    %561 = vmatpush1.msra.mxu0 %v215
    %562 = vmatprep.subr.mxu0 0.0
    %563 = vmatpush1.msra.mxu0 %v216
    %564 = vmatprep.subr.mxu0 0.0
    %565 = vmatpush1.msra.mxu0 %v217
    %566 = vmatprep.subr.mxu0 0.0
    %567 = vmatpush1.msra.mxu0 %v218
    %568 = vmatprep.subr.mxu0 0.0
    %569 = vmatpush1.msra.mxu0 %v219
    %570 = vmatprep.subr.mxu0 0.0
    %571 = vmatpush1.msra.mxu0 %v220
    %572 = vmatprep.subr.mxu0 0.0
    %573 = vmatpush1.msra.mxu0 %v221
    %574 = vmatprep.subr.mxu0 0.0
    %575 = vmatpush1.msra.mxu0 %v222
    %576 = vmatprep.subr.mxu0 0.0
    %577 = vmatpush1.msra.mxu0 %v223
    %578 = vmatprep.subr.mxu0 0.0
    %579 = vmatpush1.msra.mxu0 %v224
    %580 = vmatprep.subr.mxu0 0.0
    %581 = vmatpush1.msra.mxu0 %v225
    %582 = vmatprep.subr.mxu0 0.0
    %583 = vmatpush1.msra.mxu0 %v226
    %584 = vmatprep.subr.mxu0 0.0
    %585 = vmatpush1.msra.mxu0 %v227
    %586 = vmatprep.subr.mxu0 0.0
    %587 = vmatpush1.msra.mxu0 %v228
    %588 = vmatprep.subr.mxu0 0.0
    %589 = vmatpush1.msra.mxu0 %v229
    %590 = vmatprep.subr.mxu0 0.0
    %591 = vmatpush1.msra.mxu0 %v230
    %592 = vmatprep.mubr.f32.mxu0 %v42
    %593 = vmatmul.mubr.f32.gmra.mrb[0].mxu0 %v41
    %v594 = vpop.f32.mrb[0].mxu0
    %v595 = vadd.f32 %v490, %v594
    %v596 = vpop.f32.mrb[0].mxu0
    %597 = vmatprep.mubr.f32.mxu0 %v58
    %598 = vmatmul.mubr.f32.gmra.mrb[0].mxu0 %v57
    %v599 = vpop.f32.mrb[0].mxu0
    %v600 = vadd.f32 %v495, %v599
    %v601 = vpop.f32.mrb[0].mxu0
    %602 = vmatprep.mubr.f32.mxu0 %v74
    %603 = vmatmul.mubr.f32.gmra.mrb[0].mxu0 %v73
    %v604 = vpop.f32.mrb[0].mxu0
    %v605 = vadd.f32 %v500, %v604
    %v606 = vpop.f32.mrb[0].mxu0
    %607 = vmatprep.mubr.f32.mxu0 %v90
    %608 = vmatmul.mubr.f32.gmra.mrb[0].mxu0 %v89
    %v609 = vpop.f32.mrb[0].mxu0
    %v610 = vadd.f32 %v505, %v609
    %v611 = vpop.f32.mrb[0].mxu0
    %612 = vmatprep.mubr.f32.mxu0 %v106
    %613 = vmatmul.mubr.f32.gmra.mrb[0].mxu0 %v105
    %v614 = vpop.f32.mrb[0].mxu0
    %v615 = vadd.f32 %v510, %v614
    %v616 = vpop.f32.mrb[0].mxu0
    %617 = vmatprep.mubr.f32.mxu0 %v122
    %618 = vmatmul.mubr.f32.gmra.mrb[0].mxu0 %v121
    %v619 = vpop.f32.mrb[0].mxu0
    %v620 = vadd.f32 %v515, %v619
    %v621 = vpop.f32.mrb[0].mxu0
    %622 = vmatprep.mubr.f32.mxu0 %v138
    %623 = vmatmul.mubr.f32.gmra.mrb[0].mxu0 %v137
    %v624 = vpop.f32.mrb[0].mxu0
    %v625 = vadd.f32 %v520, %v624
    %v626 = vpop.f32.mrb[0].mxu0
    %627 = vmatprep.mubr.f32.mxu0 %v154
    %628 = vmatmul.mubr.f32.gmra.mrb[0].mxu0 %v153
    %v629 = vpop.f32.mrb[0].mxu0
    %v630 = vadd.f32 %v525, %v629
    %v631 = vpop.f32.mrb[0].mxu0
    %632 = vdwg.mxu0
    %633 = vmatprep.subr.mxu0 0.0
    %634 = vmatpush1.msra.mxu0 %v231
    %635 = vmatprep.subr.mxu0 0.0
    %636 = vmatpush1.msra.mxu0 %v232
    %637 = vmatprep.subr.mxu0 0.0
    %638 = vmatpush1.msra.mxu0 %v233
    %639 = vmatprep.subr.mxu0 0.0
    %640 = vmatpush1.msra.mxu0 %v234
    %641 = vmatprep.subr.mxu0 0.0
    %642 = vmatpush1.msra.mxu0 %v235
    %643 = vmatprep.subr.mxu0 0.0
    %644 = vmatpush1.msra.mxu0 %v236
    %645 = vmatprep.subr.mxu0 0.0
    %646 = vmatpush1.msra.mxu0 %v237
    %647 = vmatprep.subr.mxu0 0.0
    %648 = vmatpush1.msra.mxu0 %v238
    %649 = vmatprep.subr.mxu0 0.0
    %650 = vmatpush1.msra.mxu0 %v239
    %651 = vmatprep.subr.mxu0 0.0
    %652 = vmatpush1.msra.mxu0 %v240
    %653 = vmatprep.subr.mxu0 0.0
    %654 = vmatpush1.msra.mxu0 %v241
    %655 = vmatprep.subr.mxu0 0.0
    %656 = vmatpush1.msra.mxu0 %v242
    %657 = vmatprep.subr.mxu0 0.0
    %658 = vmatpush1.msra.mxu0 %v243
    %659 = vmatprep.subr.mxu0 0.0
    %660 = vmatpush1.msra.mxu0 %v244
    %661 = vmatprep.subr.mxu0 0.0
    %662 = vmatpush1.msra.mxu0 %v245
    %663 = vmatprep.subr.mxu0 0.0
    %664 = vmatpush1.msra.mxu0 %v246
    %665 = vmatprep.subr.mxu0 0.0
    %666 = vmatpush1.msra.mxu0 %v247
    %667 = vmatprep.subr.mxu0 0.0
    %668 = vmatpush1.msra.mxu0 %v248
    %669 = vmatprep.subr.mxu0 0.0
    %670 = vmatpush1.msra.mxu0 %v249
    %671 = vmatprep.subr.mxu0 0.0
    %672 = vmatpush1.msra.mxu0 %v250
    %673 = vmatprep.subr.mxu0 0.0
    %674 = vmatpush1.msra.mxu0 %v251
    %675 = vmatprep.subr.mxu0 0.0
    %676 = vmatpush1.msra.mxu0 %v252
    %677 = vmatprep.subr.mxu0 0.0
    %678 = vmatpush1.msra.mxu0 %v253
    %679 = vmatprep.subr.mxu0 0.0
    %680 = vmatpush1.msra.mxu0 %v254
    %681 = vmatprep.subr.mxu0 0.0
    %682 = vmatpush1.msra.mxu0 %v255
    %683 = vmatprep.subr.mxu0 0.0
    %684 = vmatpush1.msra.mxu0 %v256
    %685 = vmatprep.subr.mxu0 0.0
    %686 = vmatpush1.msra.mxu0 %v257
    %687 = vmatprep.subr.mxu0 0.0
    %688 = vmatpush1.msra.mxu0 %v258
    %689 = vmatprep.subr.mxu0 0.0
    %690 = vmatpush1.msra.mxu0 %v259
    %691 = vmatprep.subr.mxu0 0.0
    %692 = vmatpush1.msra.mxu0 %v260
    %693 = vmatprep.subr.mxu0 0.0
    %694 = vmatpush1.msra.mxu0 %v261
    %695 = vmatprep.subr.mxu0 0.0
    %696 = vmatpush1.msra.mxu0 %v262
    %697 = vmatprep.mubr.f32.mxu0 %v44
    %698 = vmatmul.mubr.f32.gmra.mrb[0].mxu0 %v43
    %v699 = vpop.f32.mrb[0].mxu0
    %v700 = vadd.f32 %v595, %v699
    %v701 = vpop.f32.mrb[0].mxu0
    %702 = vmatprep.mubr.f32.mxu0 %v60
    %703 = vmatmul.mubr.f32.gmra.mrb[0].mxu0 %v59
    %v704 = vpop.f32.mrb[0].mxu0
    %v705 = vadd.f32 %v600, %v704
    %v706 = vpop.f32.mrb[0].mxu0
    %707 = vmatprep.mubr.f32.mxu0 %v76
    %708 = vmatmul.mubr.f32.gmra.mrb[0].mxu0 %v75
    %v709 = vpop.f32.mrb[0].mxu0
    %v710 = vadd.f32 %v605, %v709
    %v711 = vpop.f32.mrb[0].mxu0
    %712 = vmatprep.mubr.f32.mxu0 %v92
    %713 = vmatmul.mubr.f32.gmra.mrb[0].mxu0 %v91
    %v714 = vpop.f32.mrb[0].mxu0
    %v715 = vadd.f32 %v610, %v714
    %v716 = vpop.f32.mrb[0].mxu0
    %717 = vmatprep.mubr.f32.mxu0 %v108
    %718 = vmatmul.mubr.f32.gmra.mrb[0].mxu0 %v107
    %v719 = vpop.f32.mrb[0].mxu0
    %v720 = vadd.f32 %v615, %v719
    %v721 = vpop.f32.mrb[0].mxu0
    %722 = vmatprep.mubr.f32.mxu0 %v124
    %723 = vmatmul.mubr.f32.gmra.mrb[0].mxu0 %v123
    %v724 = vpop.f32.mrb[0].mxu0
    %v725 = vadd.f32 %v620, %v724
    %v726 = vpop.f32.mrb[0].mxu0
    %727 = vmatprep.mubr.f32.mxu0 %v140
    %728 = vmatmul.mubr.f32.gmra.mrb[0].mxu0 %v139
    %v729 = vpop.f32.mrb[0].mxu0
    %v730 = vadd.f32 %v625, %v729
    %v731 = vpop.f32.mrb[0].mxu0
    %732 = vmatprep.mubr.f32.mxu0 %v156
    %733 = vmatmul.mubr.f32.gmra.mrb[0].mxu0 %v155
    %v734 = vpop.f32.mrb[0].mxu0
    %v735 = vadd.f32 %v630, %v734
    %v736 = vpop.f32.mrb[0].mxu0
    %737 = vdwg.mxu0
    %738 = vmatprep.subr.mxu0 0.0
    %739 = vmatpush1.msra.mxu0 %v263
    %740 = vmatprep.subr.mxu0 0.0
    %741 = vmatpush1.msra.mxu0 %v264
    %742 = vmatprep.subr.mxu0 0.0
    %743 = vmatpush1.msra.mxu0 %v265
    %744 = vmatprep.subr.mxu0 0.0
    %745 = vmatpush1.msra.mxu0 %v266
    %746 = vmatprep.subr.mxu0 0.0
    %747 = vmatpush1.msra.mxu0 %v267
    %748 = vmatprep.subr.mxu0 0.0
    %749 = vmatpush1.msra.mxu0 %v268
    %750 = vmatprep.subr.mxu0 0.0
    %751 = vmatpush1.msra.mxu0 %v269
    %752 = vmatprep.subr.mxu0 0.0
    %753 = vmatpush1.msra.mxu0 %v270
    %754 = vmatprep.subr.mxu0 0.0
    %755 = vmatpush1.msra.mxu0 %v271
    %756 = vmatprep.subr.mxu0 0.0
    %757 = vmatpush1.msra.mxu0 %v272
    %758 = vmatprep.subr.mxu0 0.0
    %759 = vmatpush1.msra.mxu0 %v273
    %760 = vmatprep.subr.mxu0 0.0
    %761 = vmatpush1.msra.mxu0 %v274
    %762 = vmatprep.subr.mxu0 0.0
    %763 = vmatpush1.msra.mxu0 %v275
    %764 = vmatprep.subr.mxu0 0.0
    %765 = vmatpush1.msra.mxu0 %v276
    %766 = vmatprep.subr.mxu0 0.0
    %767 = vmatpush1.msra.mxu0 %v277
    %768 = vmatprep.subr.mxu0 0.0
    %769 = vmatpush1.msra.mxu0 %v278
    %770 = vmatprep.subr.mxu0 0.0
    %771 = vmatpush1.msra.mxu0 %v279
    %772 = vmatprep.subr.mxu0 0.0
    %773 = vmatpush1.msra.mxu0 %v280
    %774 = vmatprep.subr.mxu0 0.0
    %775 = vmatpush1.msra.mxu0 %v281
    %776 = vmatprep.subr.mxu0 0.0
    %777 = vmatpush1.msra.mxu0 %v282
    %778 = vmatprep.subr.mxu0 0.0
    %779 = vmatpush1.msra.mxu0 %v283
    %780 = vmatprep.subr.mxu0 0.0
    %781 = vmatpush1.msra.mxu0 %v284
    %782 = vmatprep.subr.mxu0 0.0
    %783 = vmatpush1.msra.mxu0 %v285
    %784 = vmatprep.subr.mxu0 0.0
    %785 = vmatpush1.msra.mxu0 %v286
    %786 = vmatprep.subr.mxu0 0.0
    %787 = vmatpush1.msra.mxu0 %v287
    %788 = vmatprep.subr.mxu0 0.0
    %789 = vmatpush1.msra.mxu0 %v288
    %790 = vmatprep.subr.mxu0 0.0
    %791 = vmatpush1.msra.mxu0 %v289
    %792 = vmatprep.subr.mxu0 0.0
    %793 = vmatpush1.msra.mxu0 %v290
    %794 = vmatprep.subr.mxu0 0.0
    %795 = vmatpush1.msra.mxu0 %v291
    %796 = vmatprep.subr.mxu0 0.0
    %797 = vmatpush1.msra.mxu0 %v292
    %798 = vmatprep.subr.mxu0 0.0
    %799 = vmatpush1.msra.mxu0 %v293
    %800 = vmatprep.subr.mxu0 0.0
    %801 = vmatpush1.msra.mxu0 %v294
    %802 = vmatprep.mubr.f32.mxu0 %v46
    %803 = vmatmul.mubr.f32.gmra.mrb[0].mxu0 %v45
    %v804 = vpop.f32.mrb[0].mxu0
    %v805 = vadd.f32 %v700, %v804
    %v806 = vpop.f32.mrb[0].mxu0
    %807 = vmatprep.mubr.f32.mxu0 %v62
    %808 = vmatmul.mubr.f32.gmra.mrb[0].mxu0 %v61
    %v809 = vpop.f32.mrb[0].mxu0
    %v810 = vadd.f32 %v705, %v809
    %v811 = vpop.f32.mrb[0].mxu0
    %812 = vmatprep.mubr.f32.mxu0 %v78
    %813 = vmatmul.mubr.f32.gmra.mrb[0].mxu0 %v77
    %v814 = vpop.f32.mrb[0].mxu0
    %v815 = vadd.f32 %v710, %v814
    %v816 = vpop.f32.mrb[0].mxu0
    %817 = vmatprep.mubr.f32.mxu0 %v94
    %818 = vmatmul.mubr.f32.gmra.mrb[0].mxu0 %v93
    %v819 = vpop.f32.mrb[0].mxu0
    %v820 = vadd.f32 %v715, %v819
    %v821 = vpop.f32.mrb[0].mxu0
    %822 = vmatprep.mubr.f32.mxu0 %v110
    %823 = vmatmul.mubr.f32.gmra.mrb[0].mxu0 %v109
    %v824 = vpop.f32.mrb[0].mxu0
    %v825 = vadd.f32 %v720, %v824
    %v826 = vpop.f32.mrb[0].mxu0
    %827 = vmatprep.mubr.f32.mxu0 %v126
    %828 = vmatmul.mubr.f32.gmra.mrb[0].mxu0 %v125
    %v829 = vpop.f32.mrb[0].mxu0
    %v830 = vadd.f32 %v725, %v829
    %v831 = vpop.f32.mrb[0].mxu0
    %832 = vmatprep.mubr.f32.mxu0 %v142
    %833 = vmatmul.mubr.f32.gmra.mrb[0].mxu0 %v141
    %v834 = vpop.f32.mrb[0].mxu0
    %v835 = vadd.f32 %v730, %v834
    %v836 = vpop.f32.mrb[0].mxu0
    %837 = vmatprep.mubr.f32.mxu0 %v158
    %838 = vmatmul.mubr.f32.gmra.mrb[0].mxu0 %v157
    %v839 = vpop.f32.mrb[0].mxu0
    %v840 = vadd.f32 %v735, %v839
    %v841 = vpop.f32.mrb[0].mxu0
    %842 = vdwg.mxu0
    %843 = vmatprep.subr.mxu0 0.0
    %844 = vmatpush1.msra.mxu0 %v295
    %845 = vmatprep.subr.mxu0 0.0
    %846 = vmatpush1.msra.mxu0 %v296
    %847 = vmatprep.subr.mxu0 0.0
    %848 = vmatpush1.msra.mxu0 %v297
    %849 = vmatprep.subr.mxu0 0.0
    %850 = vmatpush1.msra.mxu0 %v298
    %851 = vmatprep.subr.mxu0 0.0
    %852 = vmatpush1.msra.mxu0 %v299
    %853 = vmatprep.subr.mxu0 0.0
    %854 = vmatpush1.msra.mxu0 %v300
    %855 = vmatprep.subr.mxu0 0.0
    %856 = vmatpush1.msra.mxu0 %v301
    %857 = vmatprep.subr.mxu0 0.0
    %858 = vmatpush1.msra.mxu0 %v302
    %859 = vmatprep.subr.mxu0 0.0
    %860 = vmatpush1.msra.mxu0 %v303
    %861 = vmatprep.subr.mxu0 0.0
    %862 = vmatpush1.msra.mxu0 %v304
    %863 = vmatprep.subr.mxu0 0.0
    %864 = vmatpush1.msra.mxu0 %v305
    %865 = vmatprep.subr.mxu0 0.0
    %866 = vmatpush1.msra.mxu0 %v306
    %867 = vmatprep.subr.mxu0 0.0
    %868 = vmatpush1.msra.mxu0 %v307
    %869 = vmatprep.subr.mxu0 0.0
    %870 = vmatpush1.msra.mxu0 %v308
    %871 = vmatprep.subr.mxu0 0.0
    %872 = vmatpush1.msra.mxu0 %v309
    %873 = vmatprep.subr.mxu0 0.0
    %874 = vmatpush1.msra.mxu0 %v310
    %875 = vmatprep.subr.mxu0 0.0
    %876 = vmatpush1.msra.mxu0 %v311
    %877 = vmatprep.subr.mxu0 0.0
    %878 = vmatpush1.msra.mxu0 %v312
    %879 = vmatprep.subr.mxu0 0.0
    %880 = vmatpush1.msra.mxu0 %v313
    %881 = vmatprep.subr.mxu0 0.0
    %882 = vmatpush1.msra.mxu0 %v314
    %883 = vmatprep.subr.mxu0 0.0
    %884 = vmatpush1.msra.mxu0 %v315
    %885 = vmatprep.subr.mxu0 0.0
    %886 = vmatpush1.msra.mxu0 %v316
    %887 = vmatprep.subr.mxu0 0.0
    %888 = vmatpush1.msra.mxu0 %v317
    %889 = vmatprep.subr.mxu0 0.0
    %890 = vmatpush1.msra.mxu0 %v318
    %891 = vmatprep.subr.mxu0 0.0
    %892 = vmatpush1.msra.mxu0 %v319
    %893 = vmatprep.subr.mxu0 0.0
    %894 = vmatpush1.msra.mxu0 %v320
    %895 = vmatprep.subr.mxu0 0.0
    %896 = vmatpush1.msra.mxu0 %v321
    %897 = vmatprep.subr.mxu0 0.0
    %898 = vmatpush1.msra.mxu0 %v322
    %899 = vmatprep.subr.mxu0 0.0
    %900 = vmatpush1.msra.mxu0 %v323
    %901 = vmatprep.subr.mxu0 0.0
    %902 = vmatpush1.msra.mxu0 %v324
    %903 = vmatprep.subr.mxu0 0.0
    %904 = vmatpush1.msra.mxu0 %v325
    %905 = vmatprep.subr.mxu0 0.0
    %906 = vmatpush1.msra.mxu0 %v326
    %907 = vmatprep.mubr.f32.mxu0 %v48
    %908 = vmatmul.mubr.f32.gmra.mrb[0].mxu0 %v47
    %v909 = vpop.f32.mrb[0].mxu0
    %v910 = vadd.f32 %v805, %v909
    %v911 = vpop.f32.mrb[0].mxu0
    %912 = vmatprep.mubr.f32.mxu0 %v64
    %913 = vmatmul.mubr.f32.gmra.mrb[0].mxu0 %v63
    %v914 = vpop.f32.mrb[0].mxu0
    %v915 = vadd.f32 %v810, %v914
    %v916 = vpop.f32.mrb[0].mxu0
    %917 = vmatprep.mubr.f32.mxu0 %v80
    %918 = vmatmul.mubr.f32.gmra.mrb[0].mxu0 %v79
    %v919 = vpop.f32.mrb[0].mxu0
    %v920 = vadd.f32 %v815, %v919
    %v921 = vpop.f32.mrb[0].mxu0
    %922 = vmatprep.mubr.f32.mxu0 %v96
    %923 = vmatmul.mubr.f32.gmra.mrb[0].mxu0 %v95
    %v924 = vpop.f32.mrb[0].mxu0
    %v925 = vadd.f32 %v820, %v924
    %v926 = vpop.f32.mrb[0].mxu0
    %927 = vmatprep.mubr.f32.mxu0 %v112
    %928 = vmatmul.mubr.f32.gmra.mrb[0].mxu0 %v111
    %v929 = vpop.f32.mrb[0].mxu0
    %v930 = vadd.f32 %v825, %v929
    %v931 = vpop.f32.mrb[0].mxu0
    %932 = vmatprep.mubr.f32.mxu0 %v128
    %933 = vmatmul.mubr.f32.gmra.mrb[0].mxu0 %v127
    %v934 = vpop.f32.mrb[0].mxu0
    %v935 = vadd.f32 %v830, %v934
    %v936 = vpop.f32.mrb[0].mxu0
    %937 = vmatprep.mubr.f32.mxu0 %v144
    %938 = vmatmul.mubr.f32.gmra.mrb[0].mxu0 %v143
    %v939 = vpop.f32.mrb[0].mxu0
    %v940 = vadd.f32 %v835, %v939
    %v941 = vpop.f32.mrb[0].mxu0
    %942 = vmatprep.mubr.f32.mxu0 %v160
    %943 = vmatmul.mubr.f32.gmra.mrb[0].mxu0 %v159
    %v944 = vpop.f32.mrb[0].mxu0
    %v945 = vadd.f32 %v840, %v944
    %v946 = vpop.f32.mrb[0].mxu0
    %947 = vdwg.mxu0
    %948 = vmatprep.subr.mxu0 0.0
    %949 = vmatpush1.msra.mxu0 %v327
    %950 = vmatprep.subr.mxu0 0.0
    %951 = vmatpush1.msra.mxu0 %v328
    %952 = vmatprep.subr.mxu0 0.0
    %953 = vmatpush1.msra.mxu0 %v329
    %954 = vmatprep.subr.mxu0 0.0
    %955 = vmatpush1.msra.mxu0 %v330
    %956 = vmatprep.subr.mxu0 0.0
    %957 = vmatpush1.msra.mxu0 %v331
    %958 = vmatprep.subr.mxu0 0.0
    %959 = vmatpush1.msra.mxu0 %v332
    %960 = vmatprep.subr.mxu0 0.0
    %961 = vmatpush1.msra.mxu0 %v333
    %962 = vmatprep.subr.mxu0 0.0
    %963 = vmatpush1.msra.mxu0 %v334
    %964 = vmatprep.subr.mxu0 0.0
    %965 = vmatpush1.msra.mxu0 %v335
    %966 = vmatprep.subr.mxu0 0.0
    %967 = vmatpush1.msra.mxu0 %v336
    %968 = vmatprep.subr.mxu0 0.0
    %969 = vmatpush1.msra.mxu0 %v337
    %970 = vmatprep.subr.mxu0 0.0
    %971 = vmatpush1.msra.mxu0 %v338
    %972 = vmatprep.subr.mxu0 0.0
    %973 = vmatpush1.msra.mxu0 %v339
    %974 = vmatprep.subr.mxu0 0.0
    %975 = vmatpush1.msra.mxu0 %v340
    %976 = vmatprep.subr.mxu0 0.0
    %977 = vmatpush1.msra.mxu0 %v341
    %978 = vmatprep.subr.mxu0 0.0
    %979 = vmatpush1.msra.mxu0 %v342
    %980 = vmatprep.subr.mxu0 0.0
    %981 = vmatpush1.msra.mxu0 %v343
    %982 = vmatprep.subr.mxu0 0.0
    %983 = vmatpush1.msra.mxu0 %v344
    %984 = vmatprep.subr.mxu0 0.0
    %985 = vmatpush1.msra.mxu0 %v345
    %986 = vmatprep.subr.mxu0 0.0
    %987 = vmatpush1.msra.mxu0 %v346
    %988 = vmatprep.subr.mxu0 0.0
    %989 = vmatpush1.msra.mxu0 %v347
    %990 = vmatprep.subr.mxu0 0.0
    %991 = vmatpush1.msra.mxu0 %v348
    %992 = vmatprep.subr.mxu0 0.0
    %993 = vmatpush1.msra.mxu0 %v349
    %994 = vmatprep.subr.mxu0 0.0
    %995 = vmatpush1.msra.mxu0 %v350
    %996 = vmatprep.subr.mxu0 0.0
    %997 = vmatpush1.msra.mxu0 %v351
    %998 = vmatprep.subr.mxu0 0.0
    %999 = vmatpush1.msra.mxu0 %v352
    %1000 = vmatprep.subr.mxu0 0.0
    %1001 = vmatpush1.msra.mxu0 %v353
    %1002 = vmatprep.subr.mxu0 0.0
    %1003 = vmatpush1.msra.mxu0 %v354
    %1004 = vmatprep.subr.mxu0 0.0
    %1005 = vmatpush1.msra.mxu0 %v355
    %1006 = vmatprep.subr.mxu0 0.0
    %1007 = vmatpush1.msra.mxu0 %v356
    %1008 = vmatprep.subr.mxu0 0.0
    %1009 = vmatpush1.msra.mxu0 %v357
    %1010 = vmatprep.subr.mxu0 0.0
    %1011 = vmatpush1.msra.mxu0 %v358
    %1012 = vmatprep.mubr.f32.mxu0 %v50
    %1013 = vmatmul.mubr.f32.gmra.mrb[0].mxu0 %v49
    %v1014 = vpop.f32.mrb[0].mxu0
    %v1015 = vadd.f32 %v910, %v1014
    %v1016 = vpop.f32.mrb[0].mxu0
    %1017 = vmatprep.mubr.f32.mxu0 %v66
    %1018 = vmatmul.mubr.f32.gmra.mrb[0].mxu0 %v65
    %v1019 = vpop.f32.mrb[0].mxu0
    %v1020 = vadd.f32 %v915, %v1019
    %v1021 = vpop.f32.mrb[0].mxu0
    %1022 = vmatprep.mubr.f32.mxu0 %v82
    %1023 = vmatmul.mubr.f32.gmra.mrb[0].mxu0 %v81
    %v1024 = vpop.f32.mrb[0].mxu0
    %v1025 = vadd.f32 %v920, %v1024
    %v1026 = vpop.f32.mrb[0].mxu0
    %1027 = vmatprep.mubr.f32.mxu0 %v98
    %1028 = vmatmul.mubr.f32.gmra.mrb[0].mxu0 %v97
    %v1029 = vpop.f32.mrb[0].mxu0
    %v1030 = vadd.f32 %v925, %v1029
    %v1031 = vpop.f32.mrb[0].mxu0
    %1032 = vmatprep.mubr.f32.mxu0 %v114
    %1033 = vmatmul.mubr.f32.gmra.mrb[0].mxu0 %v113
    %v1034 = vpop.f32.mrb[0].mxu0
    %v1035 = vadd.f32 %v930, %v1034
    %v1036 = vpop.f32.mrb[0].mxu0
    %1037 = vmatprep.mubr.f32.mxu0 %v130
    %1038 = vmatmul.mubr.f32.gmra.mrb[0].mxu0 %v129
    %v1039 = vpop.f32.mrb[0].mxu0
    %v1040 = vadd.f32 %v935, %v1039
    %v1041 = vpop.f32.mrb[0].mxu0
    %1042 = vmatprep.mubr.f32.mxu0 %v146
    %1043 = vmatmul.mubr.f32.gmra.mrb[0].mxu0 %v145
    %v1044 = vpop.f32.mrb[0].mxu0
    %v1045 = vadd.f32 %v940, %v1044
    %v1046 = vpop.f32.mrb[0].mxu0
    %1047 = vmatprep.mubr.f32.mxu0 %v162
    %1048 = vmatmul.mubr.f32.gmra.mrb[0].mxu0 %v161
    %v1049 = vpop.f32.mrb[0].mxu0
    %v1050 = vadd.f32 %v945, %v1049
    %v1051 = vpop.f32.mrb[0].mxu0
    %1052 = vdwg.mxu0
    %1053 = vmatprep.subr.mxu0 0.0
    %1054 = vmatpush1.msra.mxu0 %v359
    %1055 = vmatprep.subr.mxu0 0.0
    %1056 = vmatpush1.msra.mxu0 %v360
    %1057 = vmatprep.subr.mxu0 0.0
    %1058 = vmatpush1.msra.mxu0 %v361
    %1059 = vmatprep.subr.mxu0 0.0
    %1060 = vmatpush1.msra.mxu0 %v362
    %1061 = vmatprep.subr.mxu0 0.0
    %1062 = vmatpush1.msra.mxu0 %v363
    %1063 = vmatprep.subr.mxu0 0.0
    %1064 = vmatpush1.msra.mxu0 %v364
    %1065 = vmatprep.subr.mxu0 0.0
    %1066 = vmatpush1.msra.mxu0 %v365
    %1067 = vmatprep.subr.mxu0 0.0
    %1068 = vmatpush1.msra.mxu0 %v366
    %1069 = vmatprep.subr.mxu0 0.0
    %1070 = vmatpush1.msra.mxu0 %v367
    %1071 = vmatprep.subr.mxu0 0.0
    %1072 = vmatpush1.msra.mxu0 %v368
    %1073 = vmatprep.subr.mxu0 0.0
    %1074 = vmatpush1.msra.mxu0 %v369
    %1075 = vmatprep.subr.mxu0 0.0
    %1076 = vmatpush1.msra.mxu0 %v370
    %1077 = vmatprep.subr.mxu0 0.0
    %1078 = vmatpush1.msra.mxu0 %v371
    %1079 = vmatprep.subr.mxu0 0.0
    %1080 = vmatpush1.msra.mxu0 %v372
    %1081 = vmatprep.subr.mxu0 0.0
    %1082 = vmatpush1.msra.mxu0 %v373
    %1083 = vmatprep.subr.mxu0 0.0
    %1084 = vmatpush1.msra.mxu0 %v374
    %1085 = vmatprep.subr.mxu0 0.0
    %1086 = vmatpush1.msra.mxu0 %v375
    %1087 = vmatprep.subr.mxu0 0.0
    %1088 = vmatpush1.msra.mxu0 %v376
    %1089 = vmatprep.subr.mxu0 0.0
    %1090 = vmatpush1.msra.mxu0 %v377
    %1091 = vmatprep.subr.mxu0 0.0
    %1092 = vmatpush1.msra.mxu0 %v378
    %1093 = vmatprep.subr.mxu0 0.0
    %1094 = vmatpush1.msra.mxu0 %v379
    %1095 = vmatprep.subr.mxu0 0.0
    %1096 = vmatpush1.msra.mxu0 %v380
    %1097 = vmatprep.subr.mxu0 0.0
    %1098 = vmatpush1.msra.mxu0 %v381
    %1099 = vmatprep.subr.mxu0 0.0
    %1100 = vmatpush1.msra.mxu0 %v382
    %1101 = vmatprep.subr.mxu0 0.0
    %1102 = vmatpush1.msra.mxu0 %v383
    %1103 = vmatprep.subr.mxu0 0.0
    %1104 = vmatpush1.msra.mxu0 %v384
    %1105 = vmatprep.subr.mxu0 0.0
    %1106 = vmatpush1.msra.mxu0 %v385
    %1107 = vmatprep.subr.mxu0 0.0
    %1108 = vmatpush1.msra.mxu0 %v386
    %1109 = vmatprep.subr.mxu0 0.0
    %1110 = vmatpush1.msra.mxu0 %v387
    %1111 = vmatprep.subr.mxu0 0.0
    %1112 = vmatpush1.msra.mxu0 %v388
    %1113 = vmatprep.subr.mxu0 0.0
    %1114 = vmatpush1.msra.mxu0 %v389
    %1115 = vmatprep.subr.mxu0 0.0
    %1116 = vmatpush1.msra.mxu0 %v390
    %1117 = vmatprep.mubr.f32.mxu0 %v52
    %1118 = vmatmul.mubr.f32.gmra.mrb[0].mxu0 %v51
    %v1119 = vpop.f32.mrb[0].mxu0
    %v1120 = vadd.f32 %v1015, %v1119
    %v1121 = vpop.f32.mrb[0].mxu0
    %1122 = vmatprep.mubr.f32.mxu0 %v68
    %1123 = vmatmul.mubr.f32.gmra.mrb[0].mxu0 %v67
    %v1124 = vpop.f32.mrb[0].mxu0
    %v1125 = vadd.f32 %v1020, %v1124
    %v1126 = vpop.f32.mrb[0].mxu0
    %1127 = vmatprep.mubr.f32.mxu0 %v84
    %1128 = vmatmul.mubr.f32.gmra.mrb[0].mxu0 %v83
    %v1129 = vpop.f32.mrb[0].mxu0
    %v1130 = vadd.f32 %v1025, %v1129
    %v1131 = vpop.f32.mrb[0].mxu0
    %1132 = vmatprep.mubr.f32.mxu0 %v100
    %1133 = vmatmul.mubr.f32.gmra.mrb[0].mxu0 %v99
    %v1134 = vpop.f32.mrb[0].mxu0
    %v1135 = vadd.f32 %v1030, %v1134
    %v1136 = vpop.f32.mrb[0].mxu0
    %1137 = vmatprep.mubr.f32.mxu0 %v116
    %1138 = vmatmul.mubr.f32.gmra.mrb[0].mxu0 %v115
    %v1139 = vpop.f32.mrb[0].mxu0
    %v1140 = vadd.f32 %v1035, %v1139
    %v1141 = vpop.f32.mrb[0].mxu0
    %1142 = vmatprep.mubr.f32.mxu0 %v132
    %1143 = vmatmul.mubr.f32.gmra.mrb[0].mxu0 %v131
    %v1144 = vpop.f32.mrb[0].mxu0
    %v1145 = vadd.f32 %v1040, %v1144
    %v1146 = vpop.f32.mrb[0].mxu0
    %1147 = vmatprep.mubr.f32.mxu0 %v148
    %1148 = vmatmul.mubr.f32.gmra.mrb[0].mxu0 %v147
    %v1149 = vpop.f32.mrb[0].mxu0
    %v1150 = vadd.f32 %v1045, %v1149
    %v1151 = vpop.f32.mrb[0].mxu0
    %1152 = vmatprep.mubr.f32.mxu0 %v164
    %1153 = vmatmul.mubr.f32.gmra.mrb[0].mxu0 %v163
    %v1154 = vpop.f32.mrb[0].mxu0
    %v1155 = vadd.f32 %v1050, %v1154
    %v1156 = vpop.f32.mrb[0].mxu0
    %1157 = vdwg.mxu0
    %1158 = vmatprep.subr.mxu0 0.0
    %1159 = vmatpush1.msra.mxu0 %v391
    %1160 = vmatprep.subr.mxu0 0.0
    %1161 = vmatpush1.msra.mxu0 %v392
    %1162 = vmatprep.subr.mxu0 0.0
    %1163 = vmatpush1.msra.mxu0 %v393
    %1164 = vmatprep.subr.mxu0 0.0
    %1165 = vmatpush1.msra.mxu0 %v394
    %1166 = vmatprep.subr.mxu0 0.0
    %1167 = vmatpush1.msra.mxu0 %v395
    %1168 = vmatprep.subr.mxu0 0.0
    %1169 = vmatpush1.msra.mxu0 %v396
    %1170 = vmatprep.subr.mxu0 0.0
    %1171 = vmatpush1.msra.mxu0 %v397
    %1172 = vmatprep.subr.mxu0 0.0
    %1173 = vmatpush1.msra.mxu0 %v398
    %1174 = vmatprep.subr.mxu0 0.0
    %1175 = vmatpush1.msra.mxu0 %v399
    %1176 = vmatprep.subr.mxu0 0.0
    %1177 = vmatpush1.msra.mxu0 %v400
    %1178 = vmatprep.subr.mxu0 0.0
    %1179 = vmatpush1.msra.mxu0 %v401
    %1180 = vmatprep.subr.mxu0 0.0
    %1181 = vmatpush1.msra.mxu0 %v402
    %1182 = vmatprep.subr.mxu0 0.0
    %1183 = vmatpush1.msra.mxu0 %v403
    %1184 = vmatprep.subr.mxu0 0.0
    %1185 = vmatpush1.msra.mxu0 %v404
    %1186 = vmatprep.subr.mxu0 0.0
    %1187 = vmatpush1.msra.mxu0 %v405
    %1188 = vmatprep.subr.mxu0 0.0
    %1189 = vmatpush1.msra.mxu0 %v406
    %1190 = vmatprep.subr.mxu0 0.0
    %1191 = vmatpush1.msra.mxu0 %v407
    %1192 = vmatprep.subr.mxu0 0.0
    %1193 = vmatpush1.msra.mxu0 %v408
    %1194 = vmatprep.subr.mxu0 0.0
    %1195 = vmatpush1.msra.mxu0 %v409
    %1196 = vmatprep.subr.mxu0 0.0
    %1197 = vmatpush1.msra.mxu0 %v410
    %1198 = vmatprep.subr.mxu0 0.0
    %1199 = vmatpush1.msra.mxu0 %v411
    %1200 = vmatprep.subr.mxu0 0.0
    %1201 = vmatpush1.msra.mxu0 %v412
    %1202 = vmatprep.subr.mxu0 0.0
    %1203 = vmatpush1.msra.mxu0 %v413
    %1204 = vmatprep.subr.mxu0 0.0
    %1205 = vmatpush1.msra.mxu0 %v414
    %1206 = vmatprep.subr.mxu0 0.0
    %1207 = vmatpush1.msra.mxu0 %v415
    %1208 = vmatprep.subr.mxu0 0.0
    %1209 = vmatpush1.msra.mxu0 %v416
    %1210 = vmatprep.subr.mxu0 0.0
    %1211 = vmatpush1.msra.mxu0 %v417
    %1212 = vmatprep.subr.mxu0 0.0
    %1213 = vmatpush1.msra.mxu0 %v418
    %1214 = vmatprep.subr.mxu0 0.0
    %1215 = vmatpush1.msra.mxu0 %v419
    %1216 = vmatprep.subr.mxu0 0.0
    %1217 = vmatpush1.msra.mxu0 %v420
    %1218 = vmatprep.subr.mxu0 0.0
    %1219 = vmatpush1.msra.mxu0 %v421
    %1220 = vmatprep.subr.mxu0 0.0
    %1221 = vmatpush1.msra.mxu0 %v422
    %1222 = vmatprep.mubr.f32.mxu0 %v54
    %1223 = vmatmul.mubr.f32.gmra.mrb[0].mxu0 %v53
    %v1224 = vpop.f32.mrb[0].mxu0
    %v1225 = vadd.f32 %v1120, %v1224
    %v1226 = vpop.f32.mrb[0].mxu0
    %1227 = vmatprep.mubr.f32.mxu0 %v70
    %1228 = vmatmul.mubr.f32.gmra.mrb[0].mxu0 %v69
    %v1229 = vpop.f32.mrb[0].mxu0
    %v1230 = vadd.f32 %v1125, %v1229
    %v1231 = vpop.f32.mrb[0].mxu0
    %1232 = vmatprep.mubr.f32.mxu0 %v86
    %1233 = vmatmul.mubr.f32.gmra.mrb[0].mxu0 %v85
    %v1234 = vpop.f32.mrb[0].mxu0
    %v1235 = vadd.f32 %v1130, %v1234
    %v1236 = vpop.f32.mrb[0].mxu0
    %1237 = vmatprep.mubr.f32.mxu0 %v102
    %1238 = vmatmul.mubr.f32.gmra.mrb[0].mxu0 %v101
    %v1239 = vpop.f32.mrb[0].mxu0
    %v1240 = vadd.f32 %v1135, %v1239
    %v1241 = vpop.f32.mrb[0].mxu0
    %1242 = vmatprep.mubr.f32.mxu0 %v118
    %1243 = vmatmul.mubr.f32.gmra.mrb[0].mxu0 %v117
    %v1244 = vpop.f32.mrb[0].mxu0
    %v1245 = vadd.f32 %v1140, %v1244
    %v1246 = vpop.f32.mrb[0].mxu0
    %1247 = vmatprep.mubr.f32.mxu0 %v134
    %1248 = vmatmul.mubr.f32.gmra.mrb[0].mxu0 %v133
    %v1249 = vpop.f32.mrb[0].mxu0
    %v1250 = vadd.f32 %v1145, %v1249
    %v1251 = vpop.f32.mrb[0].mxu0
    %1252 = vmatprep.mubr.f32.mxu0 %v150
    %1253 = vmatmul.mubr.f32.gmra.mrb[0].mxu0 %v149
    %v1254 = vpop.f32.mrb[0].mxu0
    %v1255 = vadd.f32 %v1150, %v1254
    %v1256 = vpop.f32.mrb[0].mxu0
    %1257 = vmatprep.mubr.f32.mxu0 %v166
    %1258 = vmatmul.mubr.f32.gmra.mrb[0].mxu0 %v165
    %v1259 = vpop.f32.mrb[0].mxu0
    %v1260 = vadd.f32 %v1155, %v1259
    %v1261 = vpop.f32.mrb[0].mxu0
    %1262 = vdwg.mxu0
    %vm1263 = vcmask 7168
    %v1264 = vsel %vm1263, %v1225, -inf
    %v1265 = vrot.slane %v1264, 4
    %v1266 = vmax.f32 %v1264, %v1265
    %v1267 = vrot.slane %v1266, 2
    %v1268 = vmax.f32 %v1266, %v1267
    %v1269 = vrot.slane %v1268, 1
    %v1270 = vmax.f32 %v1268, %v1269
    %v1271 = vsel %vm1263, %v1230, -inf
    %v1272 = vrot.slane %v1271, 4
    %v1273 = vmax.f32 %v1271, %v1272
    %v1274 = vrot.slane %v1273, 2
    %v1275 = vmax.f32 %v1273, %v1274
    %v1276 = vrot.slane %v1275, 1
    %v1277 = vmax.f32 %v1275, %v1276
    %v1278 = vsel %vm1263, %v1235, -inf
    %v1279 = vrot.slane %v1278, 4
    %v1280 = vmax.f32 %v1278, %v1279
    %v1281 = vrot.slane %v1280, 2
    %v1282 = vmax.f32 %v1280, %v1281
    %v1283 = vrot.slane %v1282, 1
    %v1284 = vmax.f32 %v1282, %v1283
    %v1285 = vsel %vm1263, %v1240, -inf
    %v1286 = vrot.slane %v1285, 4
    %v1287 = vmax.f32 %v1285, %v1286
    %v1288 = vrot.slane %v1287, 2
    %v1289 = vmax.f32 %v1287, %v1288
    %v1290 = vrot.slane %v1289, 1
    %v1291 = vmax.f32 %v1289, %v1290
    %v1292 = vsel %vm1263, %v1245, -inf
    %v1293 = vrot.slane %v1292, 4
    %v1294 = vmax.f32 %v1292, %v1293
    %v1295 = vrot.slane %v1294, 2
    %v1296 = vmax.f32 %v1294, %v1295
    %v1297 = vrot.slane %v1296, 1
    %v1298 = vmax.f32 %v1296, %v1297
    %v1299 = vsel %vm1263, %v1250, -inf
    %v1300 = vrot.slane %v1299, 4
    %v1301 = vmax.f32 %v1299, %v1300
    %v1302 = vrot.slane %v1301, 2
    %v1303 = vmax.f32 %v1301, %v1302
    %v1304 = vrot.slane %v1303, 1
    %v1305 = vmax.f32 %v1303, %v1304
    %v1306 = vsel %vm1263, %v1255, -inf
    %v1307 = vrot.slane %v1306, 4
    %v1308 = vmax.f32 %v1306, %v1307
    %v1309 = vrot.slane %v1308, 2
    %v1310 = vmax.f32 %v1308, %v1309
    %v1311 = vrot.slane %v1310, 1
    %v1312 = vmax.f32 %v1310, %v1311
    %v1313 = vsel %vm1263, %v1260, -inf
    %v1314 = vrot.slane %v1313, 4
    %v1315 = vmax.f32 %v1313, %v1314
    %v1316 = vrot.slane %v1315, 2
    %v1317 = vmax.f32 %v1315, %v1316
    %v1318 = vrot.slane %v1317, 1
    %v1319 = vmax.f32 %v1317, %v1318
    %v1320 = vsub.f32 %v1225, %v1270
    %v1321 = vsub.f32 %v1230, %v1277
    %v1322 = vsub.f32 %v1235, %v1284
    %v1323 = vsub.f32 %v1240, %v1291
    %v1324 = vsub.f32 %v1245, %v1298
    %v1325 = vsub.f32 %v1250, %v1305
    %v1326 = vsub.f32 %v1255, %v1312
    %v1327 = vsub.f32 %v1260, %v1319
    %v1328 = vmul.f32 %v1320, 1.442695
    %v1329 = vpow.pop %v1328
    %v1330 = vmul.f32 %v1321, 1.442695
    %v1331 = vpow.pop %v1330
    %v1332 = vmul.f32 %v1322, 1.442695
    %v1333 = vpow.pop %v1332
    %v1334 = vmul.f32 %v1323, 1.442695
    %v1335 = vpow.pop %v1334
    %v1336 = vmul.f32 %v1324, 1.442695
    %v1337 = vpow.pop %v1336
    %v1338 = vmul.f32 %v1325, 1.442695
    %v1339 = vpow.pop %v1338
    %v1340 = vmul.f32 %v1326, 1.442695
    %v1341 = vpow.pop %v1340
    %v1342 = vmul.f32 %v1327, 1.442695
    %v1343 = vpow.pop %v1342
    %v1344 = vsel %vm1263, %v1329, 0.0
    %v1345 = vrot.slane %v1344, 4
    %v1346 = vadd.f32 %v1344, %v1345
    %v1347 = vrot.slane %v1346, 2
    %v1348 = vadd.f32 %v1346, %v1347
    %v1349 = vrot.slane %v1348, 1
    %v1350 = vadd.f32 %v1348, %v1349
    %v1351 = vsel %vm1263, %v1331, 0.0
    %v1352 = vrot.slane %v1351, 4
    %v1353 = vadd.f32 %v1351, %v1352
    %v1354 = vrot.slane %v1353, 2
    %v1355 = vadd.f32 %v1353, %v1354
    %v1356 = vrot.slane %v1355, 1
    %v1357 = vadd.f32 %v1355, %v1356
    %v1358 = vsel %vm1263, %v1333, 0.0
    %v1359 = vrot.slane %v1358, 4
    %v1360 = vadd.f32 %v1358, %v1359
    %v1361 = vrot.slane %v1360, 2
    %v1362 = vadd.f32 %v1360, %v1361
    %v1363 = vrot.slane %v1362, 1
    %v1364 = vadd.f32 %v1362, %v1363
    %v1365 = vsel %vm1263, %v1335, 0.0
    %v1366 = vrot.slane %v1365, 4
    %v1367 = vadd.f32 %v1365, %v1366
    %v1368 = vrot.slane %v1367, 2
    %v1369 = vadd.f32 %v1367, %v1368
    %v1370 = vrot.slane %v1369, 1
    %v1371 = vadd.f32 %v1369, %v1370
    %v1372 = vsel %vm1263, %v1337, 0.0
    %v1373 = vrot.slane %v1372, 4
    %v1374 = vadd.f32 %v1372, %v1373
    %v1375 = vrot.slane %v1374, 2
    %v1376 = vadd.f32 %v1374, %v1375
    %v1377 = vrot.slane %v1376, 1
    %v1378 = vadd.f32 %v1376, %v1377
    %v1379 = vsel %vm1263, %v1339, 0.0
    %v1380 = vrot.slane %v1379, 4
    %v1381 = vadd.f32 %v1379, %v1380
    %v1382 = vrot.slane %v1381, 2
    %v1383 = vadd.f32 %v1381, %v1382
    %v1384 = vrot.slane %v1383, 1
    %v1385 = vadd.f32 %v1383, %v1384
    %v1386 = vsel %vm1263, %v1341, 0.0
    %v1387 = vrot.slane %v1386, 4
    %v1388 = vadd.f32 %v1386, %v1387
    %v1389 = vrot.slane %v1388, 2
    %v1390 = vadd.f32 %v1388, %v1389
    %v1391 = vrot.slane %v1390, 1
    %v1392 = vadd.f32 %v1390, %v1391
    %v1393 = vsel %vm1263, %v1343, 0.0
    %v1394 = vrot.slane %v1393, 4
    %v1395 = vadd.f32 %v1393, %v1394
    %v1396 = vrot.slane %v1395, 2
    %v1397 = vadd.f32 %v1395, %v1396
    %v1398 = vrot.slane %v1397, 1
    %v1399 = vadd.f32 %v1397, %v1398
    %v1400 = vrcp.pop %v1350
    %v1401 = vmul.f32 %v1329, %v1400
    %v1402 = vrcp.pop %v1357
    %v1403 = vmul.f32 %v1331, %v1402
    %v1404 = vrcp.pop %v1364
    %v1405 = vmul.f32 %v1333, %v1404
    %v1406 = vrcp.pop %v1371
    %v1407 = vmul.f32 %v1335, %v1406
    %v1408 = vrcp.pop %v1378
    %v1409 = vmul.f32 %v1337, %v1408
    %v1410 = vrcp.pop %v1385
    %v1411 = vmul.f32 %v1339, %v1410
    %v1412 = vrcp.pop %v1392
    %v1413 = vmul.f32 %v1341, %v1412
    %v1414 = vrcp.pop %v1399
    %v1415 = vmul.f32 %v1343, %v1414
    %v1416 = vxor.u32 %v1225, 2147483648
    %v1417 = vxor.u32 %v1230, 2147483648
    %v1418 = vxor.u32 %v1235, 2147483648
    %v1419 = vxor.u32 %v1240, 2147483648
    %v1420 = vxor.u32 %v1245, 2147483648
    %v1421 = vxor.u32 %v1250, 2147483648
    %v1422 = vxor.u32 %v1255, 2147483648
    %v1423 = vxor.u32 %v1260, 2147483648
    %v1424 = vmul.f32 %v1416, 1.442695
    %v1425 = vpow.pop %v1424
    %v1426 = vmul.f32 %v1417, 1.442695
    %v1427 = vpow.pop %v1426
    %v1428 = vmul.f32 %v1418, 1.442695
    %v1429 = vpow.pop %v1428
    %v1430 = vmul.f32 %v1419, 1.442695
    %v1431 = vpow.pop %v1430
    %v1432 = vmul.f32 %v1420, 1.442695
    %v1433 = vpow.pop %v1432
    %v1434 = vmul.f32 %v1421, 1.442695
    %v1435 = vpow.pop %v1434
    %v1436 = vmul.f32 %v1422, 1.442695
    %v1437 = vpow.pop %v1436
    %v1438 = vmul.f32 %v1423, 1.442695
    %v1439 = vpow.pop %v1438
    %v1440 = vadd.f32 %v1425, 1.0
    %v1441 = vadd.f32 %v1427, 1.0
    %v1442 = vadd.f32 %v1429, 1.0
    %v1443 = vadd.f32 %v1431, 1.0
    %v1444 = vadd.f32 %v1433, 1.0
    %v1445 = vadd.f32 %v1435, 1.0
    %v1446 = vadd.f32 %v1437, 1.0
    %v1447 = vadd.f32 %v1439, 1.0
    %v1448 = vrcp.pop %v1440
    %v1449 = vmul.f32 1.0, %v1448
    %v1450 = vrcp.pop %v1441
    %v1451 = vmul.f32 1.0, %v1450
    %v1452 = vrcp.pop %v1442
    %v1453 = vmul.f32 1.0, %v1452
    %v1454 = vrcp.pop %v1443
    %v1455 = vmul.f32 1.0, %v1454
    %v1456 = vrcp.pop %v1444
    %v1457 = vmul.f32 1.0, %v1456
    %v1458 = vrcp.pop %v1445
    %v1459 = vmul.f32 1.0, %v1458
    %v1460 = vrcp.pop %v1446
    %v1461 = vmul.f32 1.0, %v1460
    %v1462 = vrcp.pop %v1447
    %v1463 = vmul.f32 1.0, %v1462
    %1472 = vrot.lane.b32.xlu0 %v1449, 127
    %v1473 = vpop.permute.xlu0 %1472
    %1474 = vrot.lane.b32.xlu0 %v1451, 127
    %v1475 = vpop.permute.xlu0 %1474
    %1476 = vrot.lane.b32.xlu0 %v1453, 127
    %v1477 = vpop.permute.xlu0 %1476
    %1478 = vrot.lane.b32.xlu0 %v1455, 127
    %v1479 = vpop.permute.xlu0 %1478
    %1480 = vrot.lane.b32.xlu0 %v1457, 127
    %v1481 = vpop.permute.xlu0 %1480
    %1482 = vrot.lane.b32.xlu0 %v1459, 127
    %v1483 = vpop.permute.xlu0 %1482
    %1484 = vrot.lane.b32.xlu0 %v1461, 127
    %v1485 = vpop.permute.xlu0 %1484
    %1486 = vrot.lane.b32.xlu0 %v1463, 127
    %v1487 = vpop.permute.xlu0 %1486
    %v1496 = vmul.f32 %v1401, %v1473
    %v1497 = vmul.f32 %v1403, %v1475
    %v1498 = vmul.f32 %v1405, %v1477
    %v1499 = vmul.f32 %v1407, %v1479
    %v1500 = vmul.f32 %v1409, %v1481
    %v1501 = vmul.f32 %v1411, %v1483
    %v1502 = vmul.f32 %v1413, %v1485
    %v1503 = vmul.f32 %v1415, %v1487
    %v1504 = vsel %vm1263, %v1496, 0.0
    %v1505 = vrot.slane %v1504, 4
    %v1506 = vadd.f32 %v1504, %v1505
    %v1507 = vrot.slane %v1506, 2
    %v1508 = vadd.f32 %v1506, %v1507
    %v1509 = vrot.slane %v1508, 1
    %v1510 = vadd.f32 %v1508, %v1509
    %v1511 = vsel %vm1263, %v1497, 0.0
    %v1512 = vrot.slane %v1511, 4
    %v1513 = vadd.f32 %v1511, %v1512
    %v1514 = vrot.slane %v1513, 2
    %v1515 = vadd.f32 %v1513, %v1514
    %v1516 = vrot.slane %v1515, 1
    %v1517 = vadd.f32 %v1515, %v1516
    %v1518 = vsel %vm1263, %v1498, 0.0
    %v1519 = vrot.slane %v1518, 4
    %v1520 = vadd.f32 %v1518, %v1519
    %v1521 = vrot.slane %v1520, 2
    %v1522 = vadd.f32 %v1520, %v1521
    %v1523 = vrot.slane %v1522, 1
    %v1524 = vadd.f32 %v1522, %v1523
    %v1525 = vsel %vm1263, %v1499, 0.0
    %v1526 = vrot.slane %v1525, 4
    %v1527 = vadd.f32 %v1525, %v1526
    %v1528 = vrot.slane %v1527, 2
    %v1529 = vadd.f32 %v1527, %v1528
    %v1530 = vrot.slane %v1529, 1
    %v1531 = vadd.f32 %v1529, %v1530
    %v1532 = vsel %vm1263, %v1500, 0.0
    %v1533 = vrot.slane %v1532, 4
    %v1534 = vadd.f32 %v1532, %v1533
    %v1535 = vrot.slane %v1534, 2
    %v1536 = vadd.f32 %v1534, %v1535
    %v1537 = vrot.slane %v1536, 1
    %v1538 = vadd.f32 %v1536, %v1537
    %v1539 = vsel %vm1263, %v1501, 0.0
    %v1540 = vrot.slane %v1539, 4
    %v1541 = vadd.f32 %v1539, %v1540
    %v1542 = vrot.slane %v1541, 2
    %v1543 = vadd.f32 %v1541, %v1542
    %v1544 = vrot.slane %v1543, 1
    %v1545 = vadd.f32 %v1543, %v1544
    %v1546 = vsel %vm1263, %v1502, 0.0
    %v1547 = vrot.slane %v1546, 4
    %v1548 = vadd.f32 %v1546, %v1547
    %v1549 = vrot.slane %v1548, 2
    %v1550 = vadd.f32 %v1548, %v1549
    %v1551 = vrot.slane %v1550, 1
    %v1552 = vadd.f32 %v1550, %v1551
    %v1553 = vsel %vm1263, %v1503, 0.0
    %v1554 = vrot.slane %v1553, 4
    %v1555 = vadd.f32 %v1553, %v1554
    %v1556 = vrot.slane %v1555, 2
    %v1557 = vadd.f32 %v1555, %v1556
    %v1558 = vrot.slane %v1557, 1
    %v1559 = vadd.f32 %v1557, %v1558
    %1561 = vset.pattern.permute.xlu0 0
    %1562 = vperm.xlu0 %1561, %v1401
    %v1563 = vpop.permute.xlu0 %1562
    %1566 = vset.pattern.permute.xlu0 0
    %1567 = vperm.xlu0 %1566, %v1403
    %v1568 = vpop.permute.xlu0 %1567
    %1571 = vset.pattern.permute.xlu0 0
    %1572 = vperm.xlu0 %1571, %v1405
    %v1573 = vpop.permute.xlu0 %1572
    %1576 = vset.pattern.permute.xlu0 0
    %1577 = vperm.xlu0 %1576, %v1407
    %v1578 = vpop.permute.xlu0 %1577
    %1581 = vset.pattern.permute.xlu0 0
    %1582 = vperm.xlu0 %1581, %v1409
    %v1583 = vpop.permute.xlu0 %1582
    %1586 = vset.pattern.permute.xlu0 0
    %1587 = vperm.xlu0 %1586, %v1411
    %v1588 = vpop.permute.xlu0 %1587
    %1591 = vset.pattern.permute.xlu0 0
    %1592 = vperm.xlu0 %1591, %v1413
    %v1593 = vpop.permute.xlu0 %1592
    %1596 = vset.pattern.permute.xlu0 0
    %1597 = vperm.xlu0 %1596, %v1415
    %v1598 = vpop.permute.xlu0 %1597
    %v1600 = vmul.f32 %v1563, %v1225
    %v1601 = vmul.f32 %v1568, %v1230
    %v1602 = vmul.f32 %v1573, %v1235
    %v1603 = vmul.f32 %v1578, %v1240
    %v1604 = vmul.f32 %v1583, %v1245
    %v1605 = vmul.f32 %v1588, %v1250
    %v1606 = vmul.f32 %v1593, %v1255
    %v1607 = vmul.f32 %v1598, %v1260
    %vm1608 = vcmask 31760
    %v1609 = vsel %vm1608, %v1600, 0.0
    %v1610 = vrot.slane %v1609, 4
    %v1611 = vadd.f32 %v1609, %v1610
    %v1612 = vrot.slane %v1611, 2
    %v1613 = vadd.f32 %v1611, %v1612
    %v1614 = vrot.slane %v1613, 1
    %v1615 = vadd.f32 %v1613, %v1614
    %v1616 = vsel %vm1608, %v1601, 0.0
    %v1617 = vrot.slane %v1616, 4
    %v1618 = vadd.f32 %v1616, %v1617
    %v1619 = vrot.slane %v1618, 2
    %v1620 = vadd.f32 %v1618, %v1619
    %v1621 = vrot.slane %v1620, 1
    %v1622 = vadd.f32 %v1620, %v1621
    %v1623 = vsel %vm1608, %v1602, 0.0
    %v1624 = vrot.slane %v1623, 4
    %v1625 = vadd.f32 %v1623, %v1624
    %v1626 = vrot.slane %v1625, 2
    %v1627 = vadd.f32 %v1625, %v1626
    %v1628 = vrot.slane %v1627, 1
    %v1629 = vadd.f32 %v1627, %v1628
    %v1630 = vsel %vm1608, %v1603, 0.0
    %v1631 = vrot.slane %v1630, 4
    %v1632 = vadd.f32 %v1630, %v1631
    %v1633 = vrot.slane %v1632, 2
    %v1634 = vadd.f32 %v1632, %v1633
    %v1635 = vrot.slane %v1634, 1
    %v1636 = vadd.f32 %v1634, %v1635
    %v1637 = vsel %vm1608, %v1604, 0.0
    %v1638 = vrot.slane %v1637, 4
    %v1639 = vadd.f32 %v1637, %v1638
    %v1640 = vrot.slane %v1639, 2
    %v1641 = vadd.f32 %v1639, %v1640
    %v1642 = vrot.slane %v1641, 1
    %v1643 = vadd.f32 %v1641, %v1642
    %v1644 = vsel %vm1608, %v1605, 0.0
    %v1645 = vrot.slane %v1644, 4
    %v1646 = vadd.f32 %v1644, %v1645
    %v1647 = vrot.slane %v1646, 2
    %v1648 = vadd.f32 %v1646, %v1647
    %v1649 = vrot.slane %v1648, 1
    %v1650 = vadd.f32 %v1648, %v1649
    %v1651 = vsel %vm1608, %v1606, 0.0
    %v1652 = vrot.slane %v1651, 4
    %v1653 = vadd.f32 %v1651, %v1652
    %v1654 = vrot.slane %v1653, 2
    %v1655 = vadd.f32 %v1653, %v1654
    %v1656 = vrot.slane %v1655, 1
    %v1657 = vadd.f32 %v1655, %v1656
    %v1658 = vsel %vm1608, %v1607, 0.0
    %v1659 = vrot.slane %v1658, 4
    %v1660 = vadd.f32 %v1658, %v1659
    %v1661 = vrot.slane %v1660, 2
    %v1662 = vadd.f32 %v1660, %v1661
    %v1663 = vrot.slane %v1662, 1
    %v1664 = vadd.f32 %v1662, %v1663
    %1673 = vrot.lane.b32.xlu0 %v1510, 1
    %v1674 = vpop.permute.xlu0 %1673
    %1675 = vrot.lane.b32.xlu0 %v1517, 1
    %v1676 = vpop.permute.xlu0 %1675
    %1677 = vrot.lane.b32.xlu0 %v1524, 1
    %v1678 = vpop.permute.xlu0 %1677
    %1679 = vrot.lane.b32.xlu0 %v1531, 1
    %v1680 = vpop.permute.xlu0 %1679
    %1681 = vrot.lane.b32.xlu0 %v1538, 1
    %v1682 = vpop.permute.xlu0 %1681
    %1683 = vrot.lane.b32.xlu0 %v1545, 1
    %v1684 = vpop.permute.xlu0 %1683
    %1685 = vrot.lane.b32.xlu0 %v1552, 1
    %v1686 = vpop.permute.xlu0 %1685
    %1687 = vrot.lane.b32.xlu0 %v1559, 1
    %v1688 = vpop.permute.xlu0 %1687
    %v1697 = vsel %vm1263, %v1473, %v1674
    %v1698 = vsel %vm1263, %v1475, %v1676
    %v1699 = vsel %vm1263, %v1477, %v1678
    %v1700 = vsel %vm1263, %v1479, %v1680
    %v1701 = vsel %vm1263, %v1481, %v1682
    %v1702 = vsel %vm1263, %v1483, %v1684
    %v1703 = vsel %vm1263, %v1485, %v1686
    %v1704 = vsel %vm1263, %v1487, %v1688
    %vm1705 = vcmask 15360
    %v1706 = vsel %vm1705, %v1697, %v1615
    %v1707 = vsel %vm1705, %v1698, %v1622
    %v1708 = vsel %vm1705, %v1699, %v1629
    %v1709 = vsel %vm1705, %v1700, %v1636
    %v1710 = vsel %vm1705, %v1701, %v1643
    %v1711 = vsel %vm1705, %v1702, %v1650
    %v1712 = vsel %vm1705, %v1703, %v1657
    %v1713 = vsel %vm1705, %v1704, %v1664
    %vm1714 = vcmask 31744
    %1715 = vst.msk [vmem:[%s2] sm:$0xff] %vm1714, %v1706
    %1716 = vst.msk [vmem:[%s2 + $0x8] sm:$0xff] %vm1714, %v1707
    %1717 = vst.msk [vmem:[%s2 + $0x10] sm:$0xff] %vm1714, %v1708
    %1718 = vst.msk [vmem:[%s2 + $0x18] sm:$0xff] %vm1714, %v1709
    %1719 = vst.msk [vmem:[%s2 + $0x20] sm:$0xff] %vm1714, %v1710
    %1720 = vst.msk [vmem:[%s2 + $0x28] sm:$0xff] %vm1714, %v1711
    %1721 = vst.msk [vmem:[%s2 + $0x30] sm:$0xff] %vm1714, %v1712
    %1722 = vst.msk [vmem:[%s2 + $0x38] sm:$0xff] %vm1714, %v1713
    // Predicated region
    $region18: #{tpu_custom_call.1} parent=1 // pred_check
      _
    $region19: #{tpu_custom_call.1} parent=1 // pred_check_branch
      %1724 = sbr.rel (0) target = $region21
    $region20: #{tpu_custom_call.1} parent=1 // pred_region
      _
    $region21: #{tpu_custom_call.1} parent=1 // pred_fallthru
      _
    // Predicated region
    $region22: #{tpu_custom_call.1} parent=1 // pred_check
      _
    $region23: #{tpu_custom_call.1} parent=1 // pred_check_branch
      %1726 = sbr.rel (0) target = $region25
    $region24: #{tpu_custom_call.1} parent=1 // pred_region
      _
    $region25: #{tpu_custom_call.1} parent=1 // pred_fallthru
      _
    %1727 = vsyncpa [#allocation3], 1
    %1728 = vsyncpa [#allocation5], 1

</llo_original>
